<compile_context>
chip_gen: v5e
topology: v5e:2x2
jax: 0.10.0
libtpu: 0.0.40
codegen_flags: <defaults>
</compile_context>

<pallas_src>
import math

import jax
import jax.numpy as jnp
from jax.experimental import pallas as pl
from jax.experimental.pallas import tpu as pltpu


def _gaussian_kernel1d(kernel_size: int):
    # torchvision default sigma when not given: 0.3 * ((k - 1) * 0.5 - 1) + 0.8
    sigma = 0.3 * ((kernel_size - 1) * 0.5 - 1) + 0.8
    half = (kernel_size - 1) * 0.5
    xs = [(-half + i) for i in range(kernel_size)]           # linspace(-half, half, k)
    pdf = [math.exp(-0.5 * (x / sigma) ** 2) for x in xs]
    s = sum(pdf)
    return [p / s for p in pdf]                               # normalized taps (static)


def _reflect_blur_matrix(n, weights, right_multiply):
    """Banded reflect-pad Gaussian blur as a dense (n, n) matrix.

    right_multiply=True  -> M[src, dst]:  y = x @ M   (blur along the last axis)
    right_multiply=False -> M[dst, src]:  y = M @ x   (blur along the first axis)
    Reflect ("reflect", no edge repeat) boundary handling is folded into the band.
    """
    k = len(weights)
    p = k // 2
    rows = [[0.0] * n for _ in range(n)]
    for dst in range(n):
        for t in range(k):
            src = dst + t - p
            if src < 0:
                src = -src
            elif src >= n:
                src = 2 * (n - 1) - src
            if right_multiply:
                rows[src][dst] += weights[t]
            else:
                rows[dst][src] += weights[t]
    return jnp.asarray(rows, dtype=jnp.float32)


def _blur_kernel(bw_ref, bh_ref, x_ref, o_ref):
    """x_ref/o_ref: (TB, H, W); bw_ref: (W, W); bh_ref: (H, H).

    Both separable passes run on the MXU as batched banded matmuls with reflect
    padding baked into the constant matrices -- no in-kernel padding, lane/sublane
    slicing or concatenation.
    """
    x = x_ref[...]
    if x.dtype != jnp.float32:
        x = x.astype(jnp.float32)
    tb, h, w = x.shape
    # Broadcasts are hoisted once per block (cheap VMEM fill; enables the batched
    # 3-D x 3-D dot_general form that Mosaic lowers directly to the MXU).
    bw = jnp.broadcast_to(bw_ref[...][None], (tb, w, w))
    bh = jnp.broadcast_to(bh_ref[...][None], (tb, h, h))
    # Horizontal (lane-axis) pass: contract W against the (W, W) reflect-blur band.
    tmp = jnp.einsum(
        "bhw,bwv->bhv", x, bw,
        preferred_element_type=jnp.float32,
        precision=jax.lax.Precision.HIGHEST,
    )
    # Vertical (sublane-axis) pass: batched left-multiply by the (H, H) band.
    out = jnp.einsum(
        "bhk,bkw->bhw", bh, tmp,
        preferred_element_type=jnp.float32,
        precision=jax.lax.Precision.HIGHEST,
    )
    # clamp(0, 1) assumes float images normalized to [0, 1] (same as the PyTorch module).
    o_ref[...] = jnp.clip(out, 0.0, 1.0).astype(o_ref.dtype)


def _tpu_vmem_capacity_and_cores():
    """(VMEM bytes per core, TensorCores per chip), with safe fallbacks."""
    kind = ""
    try:
        kind = jax.devices()[0].device_kind.lower()
    except Exception:
        pass
    num_tc = 2 if "v7" in kind else 1
    cap = None
    try:
        cap = int(pltpu.get_tpu_info().vmem_capacity_bytes)
    except Exception:
        cap = None
    if not cap or cap <= 0:
        cap = (64 if num_tc > 1 else 128) * 1024 * 1024
    return cap, num_tc


def _choose_block_planes(nc, h, w, itemsize, vmem_budget, num_tc):
    """How many (n, c) planes to process per grid step."""
    per_plane = 4 * h * w * itemsize                 # in + out blocks, double-buffered
    per_plane += 4 * (2 * h * w + h * h + w * w)     # f32 tmp/out + broadcast band matrices
    if itemsize != 4:
        per_plane += 4 * h * w                       # f32 upcast of the input block
    tb = max(1, min(nc, vmem_budget // max(1, per_plane)))
    if num_tc > 1 and nc >= 2 * num_tc:
        # 2-TC chips (v7x): keep >= 2 "parallel" grid steps per TensorCore.
        tb = min(tb, max(1, nc // (2 * num_tc)))
    # Prefer a tb that divides nc (no ragged tail block) unless that would shrink the
    # block by more than 2x; otherwise keep tb and let the last block be ragged.
    tb_div = tb
    while tb_div > 1 and nc % tb_div:
        tb_div -= 1
    if nc % tb == 0 or 2 * tb_div >= tb:
        tb = tb_div
    if num_tc > 1:
        steps = -(-nc // tb)
        if steps % 2 == 1 and steps < nc:
            # Nudge toward an even number of parallel steps so both TCs stay busy.
            for cand in range(tb - 1, max(1, (2 * tb) // 3) - 1, -1):
                if (-(-nc // cand)) % 2 == 0:
                    tb = cand
                    break
    return tb


def gaussian_blur(image, kernel_size):
    """image: (N, C, H, W) float in [0, 1]. Returns blurred + clamped image."""
    if kernel_size == 0:
        return image  # module semantics: kernel_size == 0 is a no-op
    if kernel_size < 0 or kernel_size % 2 == 0:
        # torchvision rejects even / non-positive kernel sizes; the module's
        # get_random_kernel_size() only produces odd sizes.
        raise ValueError("kernel_size must be a positive odd integer")

    N, C, H, W = image.shape
    p = kernel_size // 2
    if p >= H or p >= W:
        raise ValueError("reflect padding requires kernel_size // 2 < H and < W")

    weights = _gaussian_kernel1d(kernel_size)
    bw = _reflect_blur_matrix(W, weights, right_multiply=True)    # (W, W): y = x @ bw
    bh = _reflect_blur_matrix(H, weights, right_multiply=False)   # (H, H): y = bh @ x

    nc = N * C
    x = image.reshape(nc, H, W)

    vmem_cap, num_tc = _tpu_vmem_capacity_and_cores()
    budget = int(vmem_cap * 0.45)          # working-set budget used to size TB
    vmem_limit = int(vmem_cap * 0.75)      # scoped-VMEM limit handed to Mosaic
    tb = _choose_block_planes(nc, H, W, image.dtype.itemsize, budget, num_tc)

    out = pl.pallas_call(
        _blur_kernel,
        out_shape=jax.ShapeDtypeStruct((nc, H, W), image.dtype),
        grid=(pl.cdiv(nc, tb),),
        in_specs=[
            pl.BlockSpec((W, W), lambda i: (0, 0)),        # horizontal band (revisited)
            pl.BlockSpec((H, H), lambda i: (0, 0)),        # vertical band (revisited)
            pl.BlockSpec((tb, H, W), lambda i: (i, 0, 0)),
        ],
        out_specs=pl.BlockSpec((tb, H, W), lambda i: (i, 0, 0)),
        compiler_params=pltpu.CompilerParams(
            dimension_semantics=("parallel",),
            vmem_limit_bytes=vmem_limit,
        ),
    )(bw, bh, x)
    return out.reshape(N, C, H, W)


def _reference_blur(image, kernel_size):
    """Pure-JAX reference (reflect pad + separable conv + clamp), for validation."""
    w = _gaussian_kernel1d(kernel_size)
    p = kernel_size // 2
    H, W = image.shape[-2:]
    xp = jnp.pad(image.astype(jnp.float32), ((0, 0), (0, 0), (p, p), (p, p)), mode="reflect")
    tmp = sum(w[t] * xp[..., :, t:t + W] for t in range(kernel_size))
    out = sum(w[t] * tmp[..., t:t + H, :] for t in range(kernel_size))
    return jnp.clip(out, 0.0, 1.0).astype(image.dtype)


if __name__ == "__main__":
    key = jax.random.PRNGKey(0)
    x = jax.random.uniform(key, (2, 4, 16, 16), dtype=jnp.float32)
    kernel_size = 5  # module picks a random odd size in [min, max]; fixed here for determinism

    assert gaussian_blur(x, 0) is x  # kernel_size == 0 is a pass-through

    y = gaussian_blur(x, kernel_size)
    jax.block_until_ready(y)

    assert y.shape == x.shape and y.dtype == x.dtype
    assert bool(jnp.all(y >= 0.0)) and bool(jnp.all(y <= 1.0))
    y_ref = _reference_blur(x, kernel_size)
    # Tolerance leaves margin for MXU f32 multi-pass rounding; structural errors
    # (wrong reflect index / normalization) would be >= 1e-2.
    assert bool(jnp.allclose(y, y_ref, rtol=1e-3, atol=1e-3)), float(jnp.max(jnp.abs(y - y_ref)))
    print("KERNEL_OK")
</pallas_src>

<mosaic_0001>
module attributes {stable_mosaic.version = 11 : i64} {
  func.func @_blur_kernel(%arg0: i32, %arg1: memref<16x16xf32, #tpu.memory_space<vmem>>, %arg2: memref<16x16xf32, #tpu.memory_space<vmem>>, %arg3: memref<8x16x16xf32, #tpu.memory_space<vmem>>, %arg4: memref<8x16x16xf32, #tpu.memory_space<vmem>>) attributes {dimension_semantics = [#tpu.dimension_semantics<parallel>], iteration_bounds = array<i64: 1>, scalar_prefetch = 0 : i64, scratch_operands = 0 : i64, tpu.core_type = #tpu.core_type<tc>, window_params = [{pipeline_mode = #tpu.pipeline_mode<synchronous>, transform_indices = @transform_0, window_bounds = array<i64: 16, 16>}, {pipeline_mode = #tpu.pipeline_mode<synchronous>, transform_indices = @transform_1, window_bounds = array<i64: 16, 16>}, {transform_indices = @transform_2, window_bounds = array<i64: 8, 16, 16>}, {transform_indices = @transform_3, window_bounds = array<i64: 8, 16, 16>}]} {
    %c0 = arith.constant 0 : index
    %c0_0 = arith.constant 0 : index
    %c0_1 = arith.constant 0 : index
    %0 = vector.load %arg3[%c0, %c0_0, %c0_1] : memref<8x16x16xf32, #tpu.memory_space<vmem>>, vector<8x16x16xf32>
    %c0_2 = arith.constant 0 : index
    %c0_3 = arith.constant 0 : index
    %1 = vector.load %arg1[%c0_2, %c0_3] : memref<16x16xf32, #tpu.memory_space<vmem>>, vector<16x16xf32>
    %2 = vector.shape_cast %1 : vector<16x16xf32> to vector<1x16x16xf32>
    %3 = vector.shape_cast %2 : vector<1x16x16xf32> to vector<1x16x16xf32>
    %4 = vector.broadcast %3 : vector<1x16x16xf32> to vector<8x16x16xf32>
    %c0_4 = arith.constant 0 : index
    %c0_5 = arith.constant 0 : index
    %5 = vector.load %arg2[%c0_4, %c0_5] : memref<16x16xf32, #tpu.memory_space<vmem>>, vector<16x16xf32>
    %6 = vector.shape_cast %5 : vector<16x16xf32> to vector<1x16x16xf32>
    %7 = vector.shape_cast %6 : vector<1x16x16xf32> to vector<1x16x16xf32>
    %8 = vector.broadcast %7 : vector<1x16x16xf32> to vector<8x16x16xf32>
    "tpu.trace_start"() <{level = 10 : i32, message = "bhw,bwv->bhv"}> : () -> ()
    %cst = arith.constant dense<0.000000e+00> : vector<8x16x16xf32>
    %9 = tpu.matmul %0, %4, %cst {dimension_numbers = #tpu.dot_dimension_numbers<[2], [1], [1], [2], [0, 0, 0, 1, 1, 2], [0], [0]>, precision = #tpu.contract_precision<fp32>} : vector<8x16x16xf32>, vector<8x16x16xf32>, vector<8x16x16xf32> -> vector<8x16x16xf32>
    "tpu.trace_stop"() : () -> ()
    "tpu.trace_start"() <{level = 10 : i32, message = "bhk,bkw->bhw"}> : () -> ()
    %cst_6 = arith.constant dense<0.000000e+00> : vector<8x16x16xf32>
    %10 = tpu.matmul %8, %9, %cst_6 {dimension_numbers = #tpu.dot_dimension_numbers<[2], [1], [1], [2], [0, 0, 0, 1, 1, 2], [0], [0]>, precision = #tpu.contract_precision<fp32>} : vector<8x16x16xf32>, vector<8x16x16xf32>, vector<8x16x16xf32> -> vector<8x16x16xf32>
    %cst_7 = arith.constant 0.000000e+00 : f32
    %cst_8 = arith.constant 1.000000e+00 : f32
    "tpu.trace_stop"() : () -> ()
    %11 = vector.broadcast %cst_7 : f32 to vector<8x16x16xf32>
    %12 = arith.maximumf %11, %10 : vector<8x16x16xf32>
    %13 = vector.broadcast %cst_8 : f32 to vector<8x16x16xf32>
    %14 = arith.minimumf %13, %12 : vector<8x16x16xf32>
    %c0_9 = arith.constant 0 : index
    %c0_10 = arith.constant 0 : index
    %c0_11 = arith.constant 0 : index
    %15 = vector.load %arg4[%c0_9, %c0_10, %c0_11] : memref<8x16x16xf32, #tpu.memory_space<vmem>>, vector<8x16x16xf32>
    tpu.vector_store %arg4[%c0_9, %c0_10, %c0_11], %14 {strides = array<i32>} : memref<8x16x16xf32, #tpu.memory_space<vmem>>, vector<8x16x16xf32>,
    return
  }
  func.func @transform_0(%arg0: i32) -> (i32, i32) {
    %c0_i32 = arith.constant 0 : i32
    %c0_i32_0 = arith.constant 0 : i32
    %c0_i32_1 = arith.constant 0 : i32
    return %c0_i32, %c0_i32_0 : i32, i32
  }
  func.func @transform_1(%arg0: i32) -> (i32, i32) {
    %c0_i32 = arith.constant 0 : i32
    %c0_i32_0 = arith.constant 0 : i32
    %c0_i32_1 = arith.constant 0 : i32
    return %c0_i32, %c0_i32_0 : i32, i32
  }
  func.func @transform_2(%arg0: i32) -> (i32, i32, i32) {
    %c0_i32 = arith.constant 0 : i32
    %c0_i32_0 = arith.constant 0 : i32
    %c0_i32_1 = arith.constant 0 : i32
    return %arg0, %c0_i32, %c0_i32_0 : i32, i32, i32
  }
  func.func @transform_3(%arg0: i32) -> (i32, i32, i32) {
    %c0_i32 = arith.constant 0 : i32
    %c0_i32_0 = arith.constant 0 : i32
    %c0_i32_1 = arith.constant 0 : i32
    return %arg0, %c0_i32, %c0_i32_0 : i32, i32, i32
  }
}

</mosaic_0001>

<llo_original>
// kernel: tpu_custom_call.1
$region0: #{tpu_custom_call.1}
  #allocation0 [shape = 'u32[]', space=smem, size = 0x4, offset = 0x4, fixed_abs, tag = 'smem constant byte address 0x4 - core index']
  #allocation1 [shape = 'u32[72,128]{1,0:T(1,128)}', space=vmem, size = 0x9000, scoped, tag = 'internal scratch']
  %s0 = inlined_call_operand.hbm [shape: f32[16,16], index: 0, kind: input, shape index: {}]
  %s1 = inlined_call_operand.hbm [shape: f32[16,16], index: 1, kind: input, shape index: {}]
  %s2 = inlined_call_operand.hbm [shape: f32[8,16,16], index: 2, kind: input, shape index: {}]
  %s3 = inlined_call_operand.hbm [shape: f32[8,16,16], index: 3, kind: output, shape index: {}]
  %s4 = sld [smem:[#allocation0]]
  $region34: #{tpu_custom_call.1} parent=0
    _
  %s6 = ssub.s32 1, %s4
  %s7 = scalar_select 0, %s6, %s4
  $region1: #{tpu_custom_call.1} parent=0
    #allocation2 [shape = 'u8[8192]{0}', space=vmem, size = 0x2000, scoped, tag = 'input window, operand 0, single buffered']
    #allocation3 [shape = 's32[1]{0}', space=sflag, size = 0x4, scoped, tag = 'scoped memory for tpu_custom_call.1']
    #allocation4 [shape = 's32[1]{0}', space=sflag, size = 0x4, scoped, tag = 'scoped memory for tpu_custom_call.1']
    #allocation5 [shape = 'u8[8192]{0}', space=vmem, size = 0x2000, scoped, tag = 'input window, operand 1, single buffered']
    #allocation6 [shape = 's32[1]{0}', space=sflag, size = 0x4, scoped, tag = 'scoped memory for tpu_custom_call.1']
    #allocation7 [shape = 'u8[65536]{0}', space=vmem, size = 0x10000, scoped, tag = 'input window, operand 2, single buffered']
    #allocation8 [shape = 'u8[65536]{0}', space=vmem, size = 0x10000, scoped, tag = 'output window, operand 0, single buffered']
    %8 = vsyncpa [#allocation3], 0
    %9 = vsyncpa [#allocation6], 0
    %10 = vsyncpa [#allocation4], 0
    // Predicated region
    $region2: #{tpu_custom_call.1} parent=1 // pred_check
      _
    $region3: #{tpu_custom_call.1} parent=1 // pred_check_branch
      %12 = sbr.rel (0) target = $region5
    $region4: #{tpu_custom_call.1} parent=1 // pred_region
      %14 = vsyncadd [#allocation3], 0
      %s15 = sshll.u32 %s0, 4
      %s16 = int_to_ptr.hbm [resolvable:$true] %s15
      %s17 = sshll.u32 [#allocation2], 4
      %s18 = int_to_ptr.vmem [resolvable:$true] %s17
      %23 = dma.hbm_to_vmem [thread:$0]  %s16, 256, %s18, [#allocation3], 128, 128, 8
    $region5: #{tpu_custom_call.1} parent=1 // pred_fallthru
      _
    // Predicated region
    $region6: #{tpu_custom_call.1} parent=1 // pred_check
      _
    $region7: #{tpu_custom_call.1} parent=1 // pred_check_branch
      %25 = sbr.rel (0) target = $region9
    $region8: #{tpu_custom_call.1} parent=1 // pred_region
      %27 = vsyncadd [#allocation6], 0
      %s28 = sshll.u32 %s1, 4
      %s29 = int_to_ptr.hbm [resolvable:$true] %s28
      %s30 = sshll.u32 [#allocation5], 4
      %s31 = int_to_ptr.vmem [resolvable:$true] %s30
      %36 = dma.hbm_to_vmem [thread:$0]  %s29, 256, %s31, [#allocation6], 128, 128, 8
    $region9: #{tpu_custom_call.1} parent=1 // pred_fallthru
      _
    // Predicated region
    $region10: #{tpu_custom_call.1} parent=1 // pred_check
      _
    $region11: #{tpu_custom_call.1} parent=1 // pred_check_branch
      %38 = sbr.rel (0) target = $region13
    $region12: #{tpu_custom_call.1} parent=1 // pred_region
      %40 = vsyncadd [#allocation6], 0
      %s41 = sshll.u32 %s2, 4
      %s42 = int_to_ptr.hbm [resolvable:$true] %s41
      %s43 = sshll.u32 [#allocation7], 4
      %s44 = int_to_ptr.vmem [resolvable:$true] %s43
      %49 = dma.hbm_to_vmem [thread:$0]  %s42, 2048, %s44, [#allocation6], 128, 128, 8
    $region13: #{tpu_custom_call.1} parent=1 // pred_fallthru
      _
    // Predicated region
    $region14: #{tpu_custom_call.1} parent=1 // pred_check
      _
    $region15: #{tpu_custom_call.1} parent=1 // pred_check_branch
      %51 = sbr.rel (0) target = $region17
    $region16: #{tpu_custom_call.1} parent=1 // pred_region
      %53 = dma.done [#allocation3], 256
    $region17: #{tpu_custom_call.1} parent=1 // pred_fallthru
      _
    // Predicated region
    $region18: #{tpu_custom_call.1} parent=1 // pred_check
      _
    $region19: #{tpu_custom_call.1} parent=1 // pred_check_branch
      %55 = sbr.rel (0) target = $region21
    $region20: #{tpu_custom_call.1} parent=1 // pred_region
      %57 = dma.done [#allocation6], 256
    $region21: #{tpu_custom_call.1} parent=1 // pred_fallthru
      _
    // Predicated region
    $region22: #{tpu_custom_call.1} parent=1 // pred_check
      _
    $region23: #{tpu_custom_call.1} parent=1 // pred_check_branch
      %59 = sbr.rel (0) target = $region25
    $region24: #{tpu_custom_call.1} parent=1 // pred_region
      %61 = dma.done [#allocation6], 2048
    $region25: #{tpu_custom_call.1} parent=1 // pred_fallthru
      _
    %v62 = vld [vmem:[#allocation7] sm:$0xff]
    %v63 = vld [vmem:[#allocation7 + $0x8] sm:$0xff]
    %v64 = vld [vmem:[#allocation7 + $0x10] sm:$0xff]
    %v65 = vld [vmem:[#allocation7 + $0x18] sm:$0xff]
    %v66 = vld [vmem:[#allocation7 + $0x20] sm:$0xff]
    %v67 = vld [vmem:[#allocation7 + $0x28] sm:$0xff]
    %v68 = vld [vmem:[#allocation7 + $0x30] sm:$0xff]
    %v69 = vld [vmem:[#allocation7 + $0x38] sm:$0xff]
    %v70 = vld [vmem:[#allocation7 + $0x40] sm:$0xff]
    %v71 = vld [vmem:[#allocation7 + $0x48] sm:$0xff]
    %v72 = vld [vmem:[#allocation7 + $0x50] sm:$0xff]
    %v73 = vld [vmem:[#allocation7 + $0x58] sm:$0xff]
    %v74 = vld [vmem:[#allocation7 + $0x60] sm:$0xff]
    %v75 = vld [vmem:[#allocation7 + $0x68] sm:$0xff]
    %v76 = vld [vmem:[#allocation7 + $0x70] sm:$0xff]
    %v77 = vld [vmem:[#allocation7 + $0x78] sm:$0xff]
    %v78 = vld [vmem:[#allocation2] sm:$0xff]
    %v79 = vld [vmem:[#allocation2 + $0x8] sm:$0xff]
    %v80 = vld [vmem:[#allocation5] sm:$0xff]
    %v81 = vld [vmem:[#allocation5 + $0x8] sm:$0xff]
    %vm82 = vcmask 130048
    %v84 = vsel %vm82, %v62, 0
    %v87 = vsel %vm82, %v63, 0
    %89 = vmatpush.msra.mxu0 0.0
    %90 = vmatpush.msra.mxu0 0.0
    %91 = vmatpush.msra.mxu0 0.0
    %92 = vmatpush.msra.mxu0 0.0
    %93 = vmatpush.msra.mxu0 0.0
    %94 = vmatpush.msra.mxu0 0.0
    %95 = vmatpush.msra.mxu0 0.0
    %96 = vmatpush.msra.mxu0 0.0
    %97 = vmatpush.msra.mxu0 0.0
    %98 = vmatpush.msra.mxu0 0.0
    %99 = vmatpush.msra.mxu0 0.0
    %100 = vmatpush.msra.mxu0 0.0
    %101 = vmatpush.msra.mxu0 0.0
    %102 = vmatpush.msra.mxu0 0.0
    %v103 = vand.u32 %v79, 4294901760
    %104 = vmatpush.msra.mxu0 %v103
    %v105 = vand.u32 %v78, 4294901760
    %106 = vmatpush.msra.mxu0 %v105
    %v107 = vand.u32 %v84, 4294901760
    %v108 = vsub.f32 %v84, %v107
    %v109 = vand.u32 %v108, 4294901760
    %v110 = vsub.f32 %v108, %v109
    %v111 = vand.u32 %v110, 4294901760
    %112 = vmatmul.f32.gmra.mxu0 %v111
    %v113 = vpop.f32.mrf.mxu0
    %v114 = vadd.f32 0.0, %v113
    %v115 = vand.u32 %v87, 4294901760
    %v116 = vsub.f32 %v87, %v115
    %v117 = vand.u32 %v116, 4294901760
    %v118 = vsub.f32 %v116, %v117
    %v119 = vand.u32 %v118, 4294901760
    %120 = vmatmul.f32.gmra.mxu0 %v119
    %v121 = vpop.f32.mrf.mxu0
    %v122 = vadd.f32 0.0, %v121
    %123 = vdwg.mxu0
    %124 = vmatpush.msra.mxu0 0.0
    %125 = vmatpush.msra.mxu0 0.0
    %126 = vmatpush.msra.mxu0 0.0
    %127 = vmatpush.msra.mxu0 0.0
    %128 = vmatpush.msra.mxu0 0.0
    %129 = vmatpush.msra.mxu0 0.0
    %130 = vmatpush.msra.mxu0 0.0
    %131 = vmatpush.msra.mxu0 0.0
    %132 = vmatpush.msra.mxu0 0.0
    %133 = vmatpush.msra.mxu0 0.0
    %134 = vmatpush.msra.mxu0 0.0
    %135 = vmatpush.msra.mxu0 0.0
    %136 = vmatpush.msra.mxu0 0.0
    %137 = vmatpush.msra.mxu0 0.0
    %v138 = vand.u32 %v79, 4294901760
    %v139 = vsub.f32 %v79, %v138
    %v140 = vand.u32 %v139, 4294901760
    %v141 = vsub.f32 %v139, %v140
    %v142 = vand.u32 %v141, 4294901760
    %143 = vmatpush.msra.mxu0 %v142
    %v144 = vand.u32 %v78, 4294901760
    %v145 = vsub.f32 %v78, %v144
    %v146 = vand.u32 %v145, 4294901760
    %v147 = vsub.f32 %v145, %v146
    %v148 = vand.u32 %v147, 4294901760
    %149 = vmatpush.msra.mxu0 %v148
    %v150 = vand.u32 %v84, 4294901760
    %151 = vmatmul.f32.gmra.mxu0 %v150
    %v152 = vpop.f32.mrf.mxu0
    %v153 = vadd.f32 %v114, %v152
    %v154 = vand.u32 %v87, 4294901760
    %155 = vmatmul.f32.gmra.mxu0 %v154
    %v156 = vpop.f32.mrf.mxu0
    %v157 = vadd.f32 %v122, %v156
    %158 = vdwg.mxu0
    %159 = vmatpush.msra.mxu0 0.0
    %160 = vmatpush.msra.mxu0 0.0
    %161 = vmatpush.msra.mxu0 0.0
    %162 = vmatpush.msra.mxu0 0.0
    %163 = vmatpush.msra.mxu0 0.0
    %164 = vmatpush.msra.mxu0 0.0
    %165 = vmatpush.msra.mxu0 0.0
    %166 = vmatpush.msra.mxu0 0.0
    %167 = vmatpush.msra.mxu0 0.0
    %168 = vmatpush.msra.mxu0 0.0
    %169 = vmatpush.msra.mxu0 0.0
    %170 = vmatpush.msra.mxu0 0.0
    %171 = vmatpush.msra.mxu0 0.0
    %172 = vmatpush.msra.mxu0 0.0
    %v173 = vand.u32 %v79, 4294901760
    %v174 = vsub.f32 %v79, %v173
    %175 = vmatpush.msra.mxu0 %v174
    %v176 = vand.u32 %v78, 4294901760
    %v177 = vsub.f32 %v78, %v176
    %178 = vmatpush.msra.mxu0 %v177
    %v179 = vand.u32 %v84, 4294901760
    %v180 = vsub.f32 %v84, %v179
    %181 = vmatmul.f32.gmra.mxu0 %v180
    %v182 = vpop.f32.mrf.mxu0
    %v183 = vadd.f32 %v153, %v182
    %v184 = vand.u32 %v87, 4294901760
    %v185 = vsub.f32 %v87, %v184
    %186 = vmatmul.f32.gmra.mxu0 %v185
    %v187 = vpop.f32.mrf.mxu0
    %v188 = vadd.f32 %v157, %v187
    %189 = vdwg.mxu0
    %190 = vmatpush.msra.mxu0 0.0
    %191 = vmatpush.msra.mxu0 0.0
    %192 = vmatpush.msra.mxu0 0.0
    %193 = vmatpush.msra.mxu0 0.0
    %194 = vmatpush.msra.mxu0 0.0
    %195 = vmatpush.msra.mxu0 0.0
    %196 = vmatpush.msra.mxu0 0.0
    %197 = vmatpush.msra.mxu0 0.0
    %198 = vmatpush.msra.mxu0 0.0
    %199 = vmatpush.msra.mxu0 0.0
    %200 = vmatpush.msra.mxu0 0.0
    %201 = vmatpush.msra.mxu0 0.0
    %202 = vmatpush.msra.mxu0 0.0
    %203 = vmatpush.msra.mxu0 0.0
    %v204 = vand.u32 %v79, 4294901760
    %205 = vmatpush.msra.mxu0 %v204
    %v206 = vand.u32 %v78, 4294901760
    %207 = vmatpush.msra.mxu0 %v206
    %v208 = vand.u32 %v84, 4294901760
    %v209 = vsub.f32 %v84, %v208
    %v210 = vand.u32 %v209, 4294901760
    %211 = vmatmul.f32.gmra.mxu0 %v210
    %v212 = vpop.f32.mrf.mxu0
    %v213 = vadd.f32 %v183, %v212
    %v214 = vand.u32 %v87, 4294901760
    %v215 = vsub.f32 %v87, %v214
    %v216 = vand.u32 %v215, 4294901760
    %217 = vmatmul.f32.gmra.mxu0 %v216
    %v218 = vpop.f32.mrf.mxu0
    %v219 = vadd.f32 %v188, %v218
    %220 = vdwg.mxu0
    %221 = vmatpush.msra.mxu0 0.0
    %222 = vmatpush.msra.mxu0 0.0
    %223 = vmatpush.msra.mxu0 0.0
    %224 = vmatpush.msra.mxu0 0.0
    %225 = vmatpush.msra.mxu0 0.0
    %226 = vmatpush.msra.mxu0 0.0
    %227 = vmatpush.msra.mxu0 0.0
    %228 = vmatpush.msra.mxu0 0.0
    %229 = vmatpush.msra.mxu0 0.0
    %230 = vmatpush.msra.mxu0 0.0
    %231 = vmatpush.msra.mxu0 0.0
    %232 = vmatpush.msra.mxu0 0.0
    %233 = vmatpush.msra.mxu0 0.0
    %234 = vmatpush.msra.mxu0 0.0
    %v235 = vand.u32 %v79, 4294901760
    %v236 = vsub.f32 %v79, %v235
    %v237 = vand.u32 %v236, 4294901760
    %238 = vmatpush.msra.mxu0 %v237
    %v239 = vand.u32 %v78, 4294901760
    %v240 = vsub.f32 %v78, %v239
    %v241 = vand.u32 %v240, 4294901760
    %242 = vmatpush.msra.mxu0 %v241
    %v243 = vand.u32 %v84, 4294901760
    %244 = vmatmul.f32.gmra.mxu0 %v243
    %v245 = vpop.f32.mrf.mxu0
    %v246 = vadd.f32 %v213, %v245
    %v247 = vand.u32 %v87, 4294901760
    %248 = vmatmul.f32.gmra.mxu0 %v247
    %v249 = vpop.f32.mrf.mxu0
    %v250 = vadd.f32 %v219, %v249
    %251 = vdwg.mxu0
    %252 = vmatpush.msra.mxu0 0.0
    %253 = vmatpush.msra.mxu0 0.0
    %254 = vmatpush.msra.mxu0 0.0
    %255 = vmatpush.msra.mxu0 0.0
    %256 = vmatpush.msra.mxu0 0.0
    %257 = vmatpush.msra.mxu0 0.0
    %258 = vmatpush.msra.mxu0 0.0
    %259 = vmatpush.msra.mxu0 0.0
    %260 = vmatpush.msra.mxu0 0.0
    %261 = vmatpush.msra.mxu0 0.0
    %262 = vmatpush.msra.mxu0 0.0
    %263 = vmatpush.msra.mxu0 0.0
    %264 = vmatpush.msra.mxu0 0.0
    %265 = vmatpush.msra.mxu0 0.0
    %v266 = vand.u32 %v79, 4294901760
    %267 = vmatpush.msra.mxu0 %v266
    %v268 = vand.u32 %v78, 4294901760
    %269 = vmatpush.msra.mxu0 %v268
    %v270 = vand.u32 %v84, 4294901760
    %271 = vmatmul.f32.gmra.mxu0 %v270
    %v272 = vpop.f32.mrf.mxu0
    %v273 = vadd.f32 %v246, %v272
    %v274 = vand.u32 %v87, 4294901760
    %275 = vmatmul.f32.gmra.mxu0 %v274
    %v276 = vpop.f32.mrf.mxu0
    %v277 = vadd.f32 %v250, %v276
    %278 = vdwg.mxu0
    %v280 = vsel %vm82, %v64, 0
    %v283 = vsel %vm82, %v65, 0
    %285 = vmatpush.msra.mxu0 0.0
    %286 = vmatpush.msra.mxu0 0.0
    %287 = vmatpush.msra.mxu0 0.0
    %288 = vmatpush.msra.mxu0 0.0
    %289 = vmatpush.msra.mxu0 0.0
    %290 = vmatpush.msra.mxu0 0.0
    %291 = vmatpush.msra.mxu0 0.0
    %292 = vmatpush.msra.mxu0 0.0
    %293 = vmatpush.msra.mxu0 0.0
    %294 = vmatpush.msra.mxu0 0.0
    %295 = vmatpush.msra.mxu0 0.0
    %296 = vmatpush.msra.mxu0 0.0
    %297 = vmatpush.msra.mxu0 0.0
    %298 = vmatpush.msra.mxu0 0.0
    %v299 = vand.u32 %v79, 4294901760
    %300 = vmatpush.msra.mxu0 %v299
    %v301 = vand.u32 %v78, 4294901760
    %302 = vmatpush.msra.mxu0 %v301
    %v303 = vand.u32 %v280, 4294901760
    %v304 = vsub.f32 %v280, %v303
    %v305 = vand.u32 %v304, 4294901760
    %v306 = vsub.f32 %v304, %v305
    %v307 = vand.u32 %v306, 4294901760
    %308 = vmatmul.f32.gmra.mxu0 %v307
    %v309 = vpop.f32.mrf.mxu0
    %v310 = vadd.f32 0.0, %v309
    %v311 = vand.u32 %v283, 4294901760
    %v312 = vsub.f32 %v283, %v311
    %v313 = vand.u32 %v312, 4294901760
    %v314 = vsub.f32 %v312, %v313
    %v315 = vand.u32 %v314, 4294901760
    %316 = vmatmul.f32.gmra.mxu0 %v315
    %v317 = vpop.f32.mrf.mxu0
    %v318 = vadd.f32 0.0, %v317
    %319 = vdwg.mxu0
    %320 = vmatpush.msra.mxu0 0.0
    %321 = vmatpush.msra.mxu0 0.0
    %322 = vmatpush.msra.mxu0 0.0
    %323 = vmatpush.msra.mxu0 0.0
    %324 = vmatpush.msra.mxu0 0.0
    %325 = vmatpush.msra.mxu0 0.0
    %326 = vmatpush.msra.mxu0 0.0
    %327 = vmatpush.msra.mxu0 0.0
    %328 = vmatpush.msra.mxu0 0.0
    %329 = vmatpush.msra.mxu0 0.0
    %330 = vmatpush.msra.mxu0 0.0
    %331 = vmatpush.msra.mxu0 0.0
    %332 = vmatpush.msra.mxu0 0.0
    %333 = vmatpush.msra.mxu0 0.0
    %v334 = vand.u32 %v79, 4294901760
    %v335 = vsub.f32 %v79, %v334
    %v336 = vand.u32 %v335, 4294901760
    %v337 = vsub.f32 %v335, %v336
    %v338 = vand.u32 %v337, 4294901760
    %339 = vmatpush.msra.mxu0 %v338
    %v340 = vand.u32 %v78, 4294901760
    %v341 = vsub.f32 %v78, %v340
    %v342 = vand.u32 %v341, 4294901760
    %v343 = vsub.f32 %v341, %v342
    %v344 = vand.u32 %v343, 4294901760
    %345 = vmatpush.msra.mxu0 %v344
    %v346 = vand.u32 %v280, 4294901760
    %347 = vmatmul.f32.gmra.mxu0 %v346
    %v348 = vpop.f32.mrf.mxu0
    %v349 = vadd.f32 %v310, %v348
    %v350 = vand.u32 %v283, 4294901760
    %351 = vmatmul.f32.gmra.mxu0 %v350
    %v352 = vpop.f32.mrf.mxu0
    %v353 = vadd.f32 %v318, %v352
    %354 = vdwg.mxu0
    %355 = vmatpush.msra.mxu0 0.0
    %356 = vmatpush.msra.mxu0 0.0
    %357 = vmatpush.msra.mxu0 0.0
    %358 = vmatpush.msra.mxu0 0.0
    %359 = vmatpush.msra.mxu0 0.0
    %360 = vmatpush.msra.mxu0 0.0
    %361 = vmatpush.msra.mxu0 0.0
    %362 = vmatpush.msra.mxu0 0.0
    %363 = vmatpush.msra.mxu0 0.0
    %364 = vmatpush.msra.mxu0 0.0
    %365 = vmatpush.msra.mxu0 0.0
    %366 = vmatpush.msra.mxu0 0.0
    %367 = vmatpush.msra.mxu0 0.0
    %368 = vmatpush.msra.mxu0 0.0
    %v369 = vand.u32 %v79, 4294901760
    %v370 = vsub.f32 %v79, %v369
    %371 = vmatpush.msra.mxu0 %v370
    %v372 = vand.u32 %v78, 4294901760
    %v373 = vsub.f32 %v78, %v372
    %374 = vmatpush.msra.mxu0 %v373
    %v375 = vand.u32 %v280, 4294901760
    %v376 = vsub.f32 %v280, %v375
    %377 = vmatmul.f32.gmra.mxu0 %v376
    %v378 = vpop.f32.mrf.mxu0
    %v379 = vadd.f32 %v349, %v378
    %v380 = vand.u32 %v283, 4294901760
    %v381 = vsub.f32 %v283, %v380
    %382 = vmatmul.f32.gmra.mxu0 %v381
    %v383 = vpop.f32.mrf.mxu0
    %v384 = vadd.f32 %v353, %v383
    %385 = vdwg.mxu0
    %386 = vmatpush.msra.mxu0 0.0
    %387 = vmatpush.msra.mxu0 0.0
    %388 = vmatpush.msra.mxu0 0.0
    %389 = vmatpush.msra.mxu0 0.0
    %390 = vmatpush.msra.mxu0 0.0
    %391 = vmatpush.msra.mxu0 0.0
    %392 = vmatpush.msra.mxu0 0.0
    %393 = vmatpush.msra.mxu0 0.0
    %394 = vmatpush.msra.mxu0 0.0
    %395 = vmatpush.msra.mxu0 0.0
    %396 = vmatpush.msra.mxu0 0.0
    %397 = vmatpush.msra.mxu0 0.0
    %398 = vmatpush.msra.mxu0 0.0
    %399 = vmatpush.msra.mxu0 0.0
    %v400 = vand.u32 %v79, 4294901760
    %401 = vmatpush.msra.mxu0 %v400
    %v402 = vand.u32 %v78, 4294901760
    %403 = vmatpush.msra.mxu0 %v402
    %v404 = vand.u32 %v280, 4294901760
    %v405 = vsub.f32 %v280, %v404
    %v406 = vand.u32 %v405, 4294901760
    %407 = vmatmul.f32.gmra.mxu0 %v406
    %v408 = vpop.f32.mrf.mxu0
    %v409 = vadd.f32 %v379, %v408
    %v410 = vand.u32 %v283, 4294901760
    %v411 = vsub.f32 %v283, %v410
    %v412 = vand.u32 %v411, 4294901760
    %413 = vmatmul.f32.gmra.mxu0 %v412
    %v414 = vpop.f32.mrf.mxu0
    %v415 = vadd.f32 %v384, %v414
    %416 = vdwg.mxu0
    %417 = vmatpush.msra.mxu0 0.0
    %418 = vmatpush.msra.mxu0 0.0
    %419 = vmatpush.msra.mxu0 0.0
    %420 = vmatpush.msra.mxu0 0.0
    %421 = vmatpush.msra.mxu0 0.0
    %422 = vmatpush.msra.mxu0 0.0
    %423 = vmatpush.msra.mxu0 0.0
    %424 = vmatpush.msra.mxu0 0.0
    %425 = vmatpush.msra.mxu0 0.0
    %426 = vmatpush.msra.mxu0 0.0
    %427 = vmatpush.msra.mxu0 0.0
    %428 = vmatpush.msra.mxu0 0.0
    %429 = vmatpush.msra.mxu0 0.0
    %430 = vmatpush.msra.mxu0 0.0
    %v431 = vand.u32 %v79, 4294901760
    %v432 = vsub.f32 %v79, %v431
    %v433 = vand.u32 %v432, 4294901760
    %434 = vmatpush.msra.mxu0 %v433
    %v435 = vand.u32 %v78, 4294901760
    %v436 = vsub.f32 %v78, %v435
    %v437 = vand.u32 %v436, 4294901760
    %438 = vmatpush.msra.mxu0 %v437
    %v439 = vand.u32 %v280, 4294901760
    %440 = vmatmul.f32.gmra.mxu0 %v439
    %v441 = vpop.f32.mrf.mxu0
    %v442 = vadd.f32 %v409, %v441
    %v443 = vand.u32 %v283, 4294901760
    %444 = vmatmul.f32.gmra.mxu0 %v443
    %v445 = vpop.f32.mrf.mxu0
    %v446 = vadd.f32 %v415, %v445
    %447 = vdwg.mxu0
    %448 = vmatpush.msra.mxu0 0.0
    %449 = vmatpush.msra.mxu0 0.0
    %450 = vmatpush.msra.mxu0 0.0
    %451 = vmatpush.msra.mxu0 0.0
    %452 = vmatpush.msra.mxu0 0.0
    %453 = vmatpush.msra.mxu0 0.0
    %454 = vmatpush.msra.mxu0 0.0
    %455 = vmatpush.msra.mxu0 0.0
    %456 = vmatpush.msra.mxu0 0.0
    %457 = vmatpush.msra.mxu0 0.0
    %458 = vmatpush.msra.mxu0 0.0
    %459 = vmatpush.msra.mxu0 0.0
    %460 = vmatpush.msra.mxu0 0.0
    %461 = vmatpush.msra.mxu0 0.0
    %v462 = vand.u32 %v79, 4294901760
    %463 = vmatpush.msra.mxu0 %v462
    %v464 = vand.u32 %v78, 4294901760
    %465 = vmatpush.msra.mxu0 %v464
    %v466 = vand.u32 %v280, 4294901760
    %467 = vmatmul.f32.gmra.mxu0 %v466
    %v468 = vpop.f32.mrf.mxu0
    %v469 = vadd.f32 %v442, %v468
    %v470 = vand.u32 %v283, 4294901760
    %471 = vmatmul.f32.gmra.mxu0 %v470
    %v472 = vpop.f32.mrf.mxu0
    %v473 = vadd.f32 %v446, %v472
    %474 = vdwg.mxu0
    %v476 = vsel %vm82, %v66, 0
    %v479 = vsel %vm82, %v67, 0
    %481 = vmatpush.msra.mxu0 0.0
    %482 = vmatpush.msra.mxu0 0.0
    %483 = vmatpush.msra.mxu0 0.0
    %484 = vmatpush.msra.mxu0 0.0
    %485 = vmatpush.msra.mxu0 0.0
    %486 = vmatpush.msra.mxu0 0.0
    %487 = vmatpush.msra.mxu0 0.0
    %488 = vmatpush.msra.mxu0 0.0
    %489 = vmatpush.msra.mxu0 0.0
    %490 = vmatpush.msra.mxu0 0.0
    %491 = vmatpush.msra.mxu0 0.0
    %492 = vmatpush.msra.mxu0 0.0
    %493 = vmatpush.msra.mxu0 0.0
    %494 = vmatpush.msra.mxu0 0.0
    %v495 = vand.u32 %v79, 4294901760
    %496 = vmatpush.msra.mxu0 %v495
    %v497 = vand.u32 %v78, 4294901760
    %498 = vmatpush.msra.mxu0 %v497
    %v499 = vand.u32 %v476, 4294901760
    %v500 = vsub.f32 %v476, %v499
    %v501 = vand.u32 %v500, 4294901760
    %v502 = vsub.f32 %v500, %v501
    %v503 = vand.u32 %v502, 4294901760
    %504 = vmatmul.f32.gmra.mxu0 %v503
    %v505 = vpop.f32.mrf.mxu0
    %v506 = vadd.f32 0.0, %v505
    %v507 = vand.u32 %v479, 4294901760
    %v508 = vsub.f32 %v479, %v507
    %v509 = vand.u32 %v508, 4294901760
    %v510 = vsub.f32 %v508, %v509
    %v511 = vand.u32 %v510, 4294901760
    %512 = vmatmul.f32.gmra.mxu0 %v511
    %v513 = vpop.f32.mrf.mxu0
    %v514 = vadd.f32 0.0, %v513
    %515 = vdwg.mxu0
    %516 = vmatpush.msra.mxu0 0.0
    %517 = vmatpush.msra.mxu0 0.0
    %518 = vmatpush.msra.mxu0 0.0
    %519 = vmatpush.msra.mxu0 0.0
    %520 = vmatpush.msra.mxu0 0.0
    %521 = vmatpush.msra.mxu0 0.0
    %522 = vmatpush.msra.mxu0 0.0
    %523 = vmatpush.msra.mxu0 0.0
    %524 = vmatpush.msra.mxu0 0.0
    %525 = vmatpush.msra.mxu0 0.0
    %526 = vmatpush.msra.mxu0 0.0
    %527 = vmatpush.msra.mxu0 0.0
    %528 = vmatpush.msra.mxu0 0.0
    %529 = vmatpush.msra.mxu0 0.0
    %v530 = vand.u32 %v79, 4294901760
    %v531 = vsub.f32 %v79, %v530
    %v532 = vand.u32 %v531, 4294901760
    %v533 = vsub.f32 %v531, %v532
    %v534 = vand.u32 %v533, 4294901760
    %535 = vmatpush.msra.mxu0 %v534
    %v536 = vand.u32 %v78, 4294901760
    %v537 = vsub.f32 %v78, %v536
    %v538 = vand.u32 %v537, 4294901760
    %v539 = vsub.f32 %v537, %v538
    %v540 = vand.u32 %v539, 4294901760
    %541 = vmatpush.msra.mxu0 %v540
    %v542 = vand.u32 %v476, 4294901760
    %543 = vmatmul.f32.gmra.mxu0 %v542
    %v544 = vpop.f32.mrf.mxu0
    %v545 = vadd.f32 %v506, %v544
    %v546 = vand.u32 %v479, 4294901760
    %547 = vmatmul.f32.gmra.mxu0 %v546
    %v548 = vpop.f32.mrf.mxu0
    %v549 = vadd.f32 %v514, %v548
    %550 = vdwg.mxu0
    %551 = vmatpush.msra.mxu0 0.0
    %552 = vmatpush.msra.mxu0 0.0
    %553 = vmatpush.msra.mxu0 0.0
    %554 = vmatpush.msra.mxu0 0.0
    %555 = vmatpush.msra.mxu0 0.0
    %556 = vmatpush.msra.mxu0 0.0
    %557 = vmatpush.msra.mxu0 0.0
    %558 = vmatpush.msra.mxu0 0.0
    %559 = vmatpush.msra.mxu0 0.0
    %560 = vmatpush.msra.mxu0 0.0
    %561 = vmatpush.msra.mxu0 0.0
    %562 = vmatpush.msra.mxu0 0.0
    %563 = vmatpush.msra.mxu0 0.0
    %564 = vmatpush.msra.mxu0 0.0
    %v565 = vand.u32 %v79, 4294901760
    %v566 = vsub.f32 %v79, %v565
    %567 = vmatpush.msra.mxu0 %v566
    %v568 = vand.u32 %v78, 4294901760
    %v569 = vsub.f32 %v78, %v568
    %570 = vmatpush.msra.mxu0 %v569
    %v571 = vand.u32 %v476, 4294901760
    %v572 = vsub.f32 %v476, %v571
    %573 = vmatmul.f32.gmra.mxu0 %v572
    %v574 = vpop.f32.mrf.mxu0
    %v575 = vadd.f32 %v545, %v574
    %v576 = vand.u32 %v479, 4294901760
    %v577 = vsub.f32 %v479, %v576
    %578 = vmatmul.f32.gmra.mxu0 %v577
    %v579 = vpop.f32.mrf.mxu0
    %v580 = vadd.f32 %v549, %v579
    %581 = vdwg.mxu0
    %582 = vmatpush.msra.mxu0 0.0
    %583 = vmatpush.msra.mxu0 0.0
    %584 = vmatpush.msra.mxu0 0.0
    %585 = vmatpush.msra.mxu0 0.0
    %586 = vmatpush.msra.mxu0 0.0
    %587 = vmatpush.msra.mxu0 0.0
    %588 = vmatpush.msra.mxu0 0.0
    %589 = vmatpush.msra.mxu0 0.0
    %590 = vmatpush.msra.mxu0 0.0
    %591 = vmatpush.msra.mxu0 0.0
    %592 = vmatpush.msra.mxu0 0.0
    %593 = vmatpush.msra.mxu0 0.0
    %594 = vmatpush.msra.mxu0 0.0
    %595 = vmatpush.msra.mxu0 0.0
    %v596 = vand.u32 %v79, 4294901760
    %597 = vmatpush.msra.mxu0 %v596
    %v598 = vand.u32 %v78, 4294901760
    %599 = vmatpush.msra.mxu0 %v598
    %v600 = vand.u32 %v476, 4294901760
    %v601 = vsub.f32 %v476, %v600
    %v602 = vand.u32 %v601, 4294901760
    %603 = vmatmul.f32.gmra.mxu0 %v602
    %v604 = vpop.f32.mrf.mxu0
    %v605 = vadd.f32 %v575, %v604
    %v606 = vand.u32 %v479, 4294901760
    %v607 = vsub.f32 %v479, %v606
    %v608 = vand.u32 %v607, 4294901760
    %609 = vmatmul.f32.gmra.mxu0 %v608
    %v610 = vpop.f32.mrf.mxu0
    %v611 = vadd.f32 %v580, %v610
    %612 = vdwg.mxu0
    %613 = vmatpush.msra.mxu0 0.0
    %614 = vmatpush.msra.mxu0 0.0
    %615 = vmatpush.msra.mxu0 0.0
    %616 = vmatpush.msra.mxu0 0.0
    %617 = vmatpush.msra.mxu0 0.0
    %618 = vmatpush.msra.mxu0 0.0
    %619 = vmatpush.msra.mxu0 0.0
    %620 = vmatpush.msra.mxu0 0.0
    %621 = vmatpush.msra.mxu0 0.0
    %622 = vmatpush.msra.mxu0 0.0
    %623 = vmatpush.msra.mxu0 0.0
    %624 = vmatpush.msra.mxu0 0.0
    %625 = vmatpush.msra.mxu0 0.0
    %626 = vmatpush.msra.mxu0 0.0
    %v627 = vand.u32 %v79, 4294901760
    %v628 = vsub.f32 %v79, %v627
    %v629 = vand.u32 %v628, 4294901760
    %630 = vmatpush.msra.mxu0 %v629
    %v631 = vand.u32 %v78, 4294901760
    %v632 = vsub.f32 %v78, %v631
    %v633 = vand.u32 %v632, 4294901760
    %634 = vmatpush.msra.mxu0 %v633
    %v635 = vand.u32 %v476, 4294901760
    %636 = vmatmul.f32.gmra.mxu0 %v635
    %v637 = vpop.f32.mrf.mxu0
    %v638 = vadd.f32 %v605, %v637
    %v639 = vand.u32 %v479, 4294901760
    %640 = vmatmul.f32.gmra.mxu0 %v639
    %v641 = vpop.f32.mrf.mxu0
    %v642 = vadd.f32 %v611, %v641
    %643 = vdwg.mxu0
    %644 = vmatpush.msra.mxu0 0.0
    %645 = vmatpush.msra.mxu0 0.0
    %646 = vmatpush.msra.mxu0 0.0
    %647 = vmatpush.msra.mxu0 0.0
    %648 = vmatpush.msra.mxu0 0.0
    %649 = vmatpush.msra.mxu0 0.0
    %650 = vmatpush.msra.mxu0 0.0
    %651 = vmatpush.msra.mxu0 0.0
    %652 = vmatpush.msra.mxu0 0.0
    %653 = vmatpush.msra.mxu0 0.0
    %654 = vmatpush.msra.mxu0 0.0
    %655 = vmatpush.msra.mxu0 0.0
    %656 = vmatpush.msra.mxu0 0.0
    %657 = vmatpush.msra.mxu0 0.0
    %v658 = vand.u32 %v79, 4294901760
    %659 = vmatpush.msra.mxu0 %v658
    %v660 = vand.u32 %v78, 4294901760
    %661 = vmatpush.msra.mxu0 %v660
    %v662 = vand.u32 %v476, 4294901760
    %663 = vmatmul.f32.gmra.mxu0 %v662
    %v664 = vpop.f32.mrf.mxu0
    %v665 = vadd.f32 %v638, %v664
    %v666 = vand.u32 %v479, 4294901760
    %667 = vmatmul.f32.gmra.mxu0 %v666
    %v668 = vpop.f32.mrf.mxu0
    %v669 = vadd.f32 %v642, %v668
    %670 = vdwg.mxu0
    %v672 = vsel %vm82, %v68, 0
    %v675 = vsel %vm82, %v69, 0
    %677 = vmatpush.msra.mxu0 0.0
    %678 = vmatpush.msra.mxu0 0.0
    %679 = vmatpush.msra.mxu0 0.0
    %680 = vmatpush.msra.mxu0 0.0
    %681 = vmatpush.msra.mxu0 0.0
    %682 = vmatpush.msra.mxu0 0.0
    %683 = vmatpush.msra.mxu0 0.0
    %684 = vmatpush.msra.mxu0 0.0
    %685 = vmatpush.msra.mxu0 0.0
    %686 = vmatpush.msra.mxu0 0.0
    %687 = vmatpush.msra.mxu0 0.0
    %688 = vmatpush.msra.mxu0 0.0
    %689 = vmatpush.msra.mxu0 0.0
    %690 = vmatpush.msra.mxu0 0.0
    %v691 = vand.u32 %v79, 4294901760
    %692 = vmatpush.msra.mxu0 %v691
    %v693 = vand.u32 %v78, 4294901760
    %694 = vmatpush.msra.mxu0 %v693
    %v695 = vand.u32 %v672, 4294901760
    %v696 = vsub.f32 %v672, %v695
    %v697 = vand.u32 %v696, 4294901760
    %v698 = vsub.f32 %v696, %v697
    %v699 = vand.u32 %v698, 4294901760
    %700 = vmatmul.f32.gmra.mxu0 %v699
    %v701 = vpop.f32.mrf.mxu0
    %v702 = vadd.f32 0.0, %v701
    %v703 = vand.u32 %v675, 4294901760
    %v704 = vsub.f32 %v675, %v703
    %v705 = vand.u32 %v704, 4294901760
    %v706 = vsub.f32 %v704, %v705
    %v707 = vand.u32 %v706, 4294901760
    %708 = vmatmul.f32.gmra.mxu0 %v707
    %v709 = vpop.f32.mrf.mxu0
    %v710 = vadd.f32 0.0, %v709
    %711 = vdwg.mxu0
    %712 = vmatpush.msra.mxu0 0.0
    %713 = vmatpush.msra.mxu0 0.0
    %714 = vmatpush.msra.mxu0 0.0
    %715 = vmatpush.msra.mxu0 0.0
    %716 = vmatpush.msra.mxu0 0.0
    %717 = vmatpush.msra.mxu0 0.0
    %718 = vmatpush.msra.mxu0 0.0
    %719 = vmatpush.msra.mxu0 0.0
    %720 = vmatpush.msra.mxu0 0.0
    %721 = vmatpush.msra.mxu0 0.0
    %722 = vmatpush.msra.mxu0 0.0
    %723 = vmatpush.msra.mxu0 0.0
    %724 = vmatpush.msra.mxu0 0.0
    %725 = vmatpush.msra.mxu0 0.0
    %v726 = vand.u32 %v79, 4294901760
    %v727 = vsub.f32 %v79, %v726
    %v728 = vand.u32 %v727, 4294901760
    %v729 = vsub.f32 %v727, %v728
    %v730 = vand.u32 %v729, 4294901760
    %731 = vmatpush.msra.mxu0 %v730
    %v732 = vand.u32 %v78, 4294901760
    %v733 = vsub.f32 %v78, %v732
    %v734 = vand.u32 %v733, 4294901760
    %v735 = vsub.f32 %v733, %v734
    %v736 = vand.u32 %v735, 4294901760
    %737 = vmatpush.msra.mxu0 %v736
    %v738 = vand.u32 %v672, 4294901760
    %739 = vmatmul.f32.gmra.mxu0 %v738
    %v740 = vpop.f32.mrf.mxu0
    %v741 = vadd.f32 %v702, %v740
    %v742 = vand.u32 %v675, 4294901760
    %743 = vmatmul.f32.gmra.mxu0 %v742
    %v744 = vpop.f32.mrf.mxu0
    %v745 = vadd.f32 %v710, %v744
    %746 = vdwg.mxu0
    %747 = vmatpush.msra.mxu0 0.0
    %748 = vmatpush.msra.mxu0 0.0
    %749 = vmatpush.msra.mxu0 0.0
    %750 = vmatpush.msra.mxu0 0.0
    %751 = vmatpush.msra.mxu0 0.0
    %752 = vmatpush.msra.mxu0 0.0
    %753 = vmatpush.msra.mxu0 0.0
    %754 = vmatpush.msra.mxu0 0.0
    %755 = vmatpush.msra.mxu0 0.0
    %756 = vmatpush.msra.mxu0 0.0
    %757 = vmatpush.msra.mxu0 0.0
    %758 = vmatpush.msra.mxu0 0.0
    %759 = vmatpush.msra.mxu0 0.0
    %760 = vmatpush.msra.mxu0 0.0
    %v761 = vand.u32 %v79, 4294901760
    %v762 = vsub.f32 %v79, %v761
    %763 = vmatpush.msra.mxu0 %v762
    %v764 = vand.u32 %v78, 4294901760
    %v765 = vsub.f32 %v78, %v764
    %766 = vmatpush.msra.mxu0 %v765
    %v767 = vand.u32 %v672, 4294901760
    %v768 = vsub.f32 %v672, %v767
    %769 = vmatmul.f32.gmra.mxu0 %v768
    %v770 = vpop.f32.mrf.mxu0
    %v771 = vadd.f32 %v741, %v770
    %v772 = vand.u32 %v675, 4294901760
    %v773 = vsub.f32 %v675, %v772
    %774 = vmatmul.f32.gmra.mxu0 %v773
    %v775 = vpop.f32.mrf.mxu0
    %v776 = vadd.f32 %v745, %v775
    %777 = vdwg.mxu0
    %778 = vmatpush.msra.mxu0 0.0
    %779 = vmatpush.msra.mxu0 0.0
    %780 = vmatpush.msra.mxu0 0.0
    %781 = vmatpush.msra.mxu0 0.0
    %782 = vmatpush.msra.mxu0 0.0
    %783 = vmatpush.msra.mxu0 0.0
    %784 = vmatpush.msra.mxu0 0.0
    %785 = vmatpush.msra.mxu0 0.0
    %786 = vmatpush.msra.mxu0 0.0
    %787 = vmatpush.msra.mxu0 0.0
    %788 = vmatpush.msra.mxu0 0.0
    %789 = vmatpush.msra.mxu0 0.0
    %790 = vmatpush.msra.mxu0 0.0
    %791 = vmatpush.msra.mxu0 0.0
    %v792 = vand.u32 %v79, 4294901760
    %793 = vmatpush.msra.mxu0 %v792
    %v794 = vand.u32 %v78, 4294901760
    %795 = vmatpush.msra.mxu0 %v794
    %v796 = vand.u32 %v672, 4294901760
    %v797 = vsub.f32 %v672, %v796
    %v798 = vand.u32 %v797, 4294901760
    %799 = vmatmul.f32.gmra.mxu0 %v798
    %v800 = vpop.f32.mrf.mxu0
    %v801 = vadd.f32 %v771, %v800
    %v802 = vand.u32 %v675, 4294901760
    %v803 = vsub.f32 %v675, %v802
    %v804 = vand.u32 %v803, 4294901760
    %805 = vmatmul.f32.gmra.mxu0 %v804
    %v806 = vpop.f32.mrf.mxu0
    %v807 = vadd.f32 %v776, %v806
    %808 = vdwg.mxu0
    %809 = vmatpush.msra.mxu0 0.0
    %810 = vmatpush.msra.mxu0 0.0
    %811 = vmatpush.msra.mxu0 0.0
    %812 = vmatpush.msra.mxu0 0.0
    %813 = vmatpush.msra.mxu0 0.0
    %814 = vmatpush.msra.mxu0 0.0
    %815 = vmatpush.msra.mxu0 0.0
    %816 = vmatpush.msra.mxu0 0.0
    %817 = vmatpush.msra.mxu0 0.0
    %818 = vmatpush.msra.mxu0 0.0
    %819 = vmatpush.msra.mxu0 0.0
    %820 = vmatpush.msra.mxu0 0.0
    %821 = vmatpush.msra.mxu0 0.0
    %822 = vmatpush.msra.mxu0 0.0
    %v823 = vand.u32 %v79, 4294901760
    %v824 = vsub.f32 %v79, %v823
    %v825 = vand.u32 %v824, 4294901760
    %826 = vmatpush.msra.mxu0 %v825
    %v827 = vand.u32 %v78, 4294901760
    %v828 = vsub.f32 %v78, %v827
    %v829 = vand.u32 %v828, 4294901760
    %830 = vmatpush.msra.mxu0 %v829
    %v831 = vand.u32 %v672, 4294901760
    %832 = vmatmul.f32.gmra.mxu0 %v831
    %v833 = vpop.f32.mrf.mxu0
    %v834 = vadd.f32 %v801, %v833
    %v835 = vand.u32 %v675, 4294901760
    %836 = vmatmul.f32.gmra.mxu0 %v835
    %v837 = vpop.f32.mrf.mxu0
    %v838 = vadd.f32 %v807, %v837
    %839 = vdwg.mxu0
    %840 = vmatpush.msra.mxu0 0.0
    %841 = vmatpush.msra.mxu0 0.0
    %842 = vmatpush.msra.mxu0 0.0
    %843 = vmatpush.msra.mxu0 0.0
    %844 = vmatpush.msra.mxu0 0.0
    %845 = vmatpush.msra.mxu0 0.0
    %846 = vmatpush.msra.mxu0 0.0
    %847 = vmatpush.msra.mxu0 0.0
    %848 = vmatpush.msra.mxu0 0.0
    %849 = vmatpush.msra.mxu0 0.0
    %850 = vmatpush.msra.mxu0 0.0
    %851 = vmatpush.msra.mxu0 0.0
    %852 = vmatpush.msra.mxu0 0.0
    %853 = vmatpush.msra.mxu0 0.0
    %v854 = vand.u32 %v79, 4294901760
    %855 = vmatpush.msra.mxu0 %v854
    %v856 = vand.u32 %v78, 4294901760
    %857 = vmatpush.msra.mxu0 %v856
    %v858 = vand.u32 %v672, 4294901760
    %859 = vmatmul.f32.gmra.mxu0 %v858
    %v860 = vpop.f32.mrf.mxu0
    %v861 = vadd.f32 %v834, %v860
    %v862 = vand.u32 %v675, 4294901760
    %863 = vmatmul.f32.gmra.mxu0 %v862
    %v864 = vpop.f32.mrf.mxu0
    %v865 = vadd.f32 %v838, %v864
    %866 = vdwg.mxu0
    %v868 = vsel %vm82, %v70, 0
    %v871 = vsel %vm82, %v71, 0
    %873 = vmatpush.msra.mxu0 0.0
    %874 = vmatpush.msra.mxu0 0.0
    %875 = vmatpush.msra.mxu0 0.0
    %876 = vmatpush.msra.mxu0 0.0
    %877 = vmatpush.msra.mxu0 0.0
    %878 = vmatpush.msra.mxu0 0.0
    %879 = vmatpush.msra.mxu0 0.0
    %880 = vmatpush.msra.mxu0 0.0
    %881 = vmatpush.msra.mxu0 0.0
    %882 = vmatpush.msra.mxu0 0.0
    %883 = vmatpush.msra.mxu0 0.0
    %884 = vmatpush.msra.mxu0 0.0
    %885 = vmatpush.msra.mxu0 0.0
    %886 = vmatpush.msra.mxu0 0.0
    %v887 = vand.u32 %v79, 4294901760
    %888 = vmatpush.msra.mxu0 %v887
    %v889 = vand.u32 %v78, 4294901760
    %890 = vmatpush.msra.mxu0 %v889
    %v891 = vand.u32 %v868, 4294901760
    %v892 = vsub.f32 %v868, %v891
    %v893 = vand.u32 %v892, 4294901760
    %v894 = vsub.f32 %v892, %v893
    %v895 = vand.u32 %v894, 4294901760
    %896 = vmatmul.f32.gmra.mxu0 %v895
    %v897 = vpop.f32.mrf.mxu0
    %v898 = vadd.f32 0.0, %v897
    %v899 = vand.u32 %v871, 4294901760
    %v900 = vsub.f32 %v871, %v899
    %v901 = vand.u32 %v900, 4294901760
    %v902 = vsub.f32 %v900, %v901
    %v903 = vand.u32 %v902, 4294901760
    %904 = vmatmul.f32.gmra.mxu0 %v903
    %v905 = vpop.f32.mrf.mxu0
    %v906 = vadd.f32 0.0, %v905
    %907 = vdwg.mxu0
    %908 = vmatpush.msra.mxu0 0.0
    %909 = vmatpush.msra.mxu0 0.0
    %910 = vmatpush.msra.mxu0 0.0
    %911 = vmatpush.msra.mxu0 0.0
    %912 = vmatpush.msra.mxu0 0.0
    %913 = vmatpush.msra.mxu0 0.0
    %914 = vmatpush.msra.mxu0 0.0
    %915 = vmatpush.msra.mxu0 0.0
    %916 = vmatpush.msra.mxu0 0.0
    %917 = vmatpush.msra.mxu0 0.0
    %918 = vmatpush.msra.mxu0 0.0
    %919 = vmatpush.msra.mxu0 0.0
    %920 = vmatpush.msra.mxu0 0.0
    %921 = vmatpush.msra.mxu0 0.0
    %v922 = vand.u32 %v79, 4294901760
    %v923 = vsub.f32 %v79, %v922
    %v924 = vand.u32 %v923, 4294901760
    %v925 = vsub.f32 %v923, %v924
    %v926 = vand.u32 %v925, 4294901760
    %927 = vmatpush.msra.mxu0 %v926
    %v928 = vand.u32 %v78, 4294901760
    %v929 = vsub.f32 %v78, %v928
    %v930 = vand.u32 %v929, 4294901760
    %v931 = vsub.f32 %v929, %v930
    %v932 = vand.u32 %v931, 4294901760
    %933 = vmatpush.msra.mxu0 %v932
    %v934 = vand.u32 %v868, 4294901760
    %935 = vmatmul.f32.gmra.mxu0 %v934
    %v936 = vpop.f32.mrf.mxu0
    %v937 = vadd.f32 %v898, %v936
    %v938 = vand.u32 %v871, 4294901760
    %939 = vmatmul.f32.gmra.mxu0 %v938
    %v940 = vpop.f32.mrf.mxu0
    %v941 = vadd.f32 %v906, %v940
    %942 = vdwg.mxu0
    %943 = vmatpush.msra.mxu0 0.0
    %944 = vmatpush.msra.mxu0 0.0
    %945 = vmatpush.msra.mxu0 0.0
    %946 = vmatpush.msra.mxu0 0.0
    %947 = vmatpush.msra.mxu0 0.0
    %948 = vmatpush.msra.mxu0 0.0
    %949 = vmatpush.msra.mxu0 0.0
    %950 = vmatpush.msra.mxu0 0.0
    %951 = vmatpush.msra.mxu0 0.0
    %952 = vmatpush.msra.mxu0 0.0
    %953 = vmatpush.msra.mxu0 0.0
    %954 = vmatpush.msra.mxu0 0.0
    %955 = vmatpush.msra.mxu0 0.0
    %956 = vmatpush.msra.mxu0 0.0
    %v957 = vand.u32 %v79, 4294901760
    %v958 = vsub.f32 %v79, %v957
    %959 = vmatpush.msra.mxu0 %v958
    %v960 = vand.u32 %v78, 4294901760
    %v961 = vsub.f32 %v78, %v960
    %962 = vmatpush.msra.mxu0 %v961
    %v963 = vand.u32 %v868, 4294901760
    %v964 = vsub.f32 %v868, %v963
    %965 = vmatmul.f32.gmra.mxu0 %v964
    %v966 = vpop.f32.mrf.mxu0
    %v967 = vadd.f32 %v937, %v966
    %v968 = vand.u32 %v871, 4294901760
    %v969 = vsub.f32 %v871, %v968
    %970 = vmatmul.f32.gmra.mxu0 %v969
    %v971 = vpop.f32.mrf.mxu0
    %v972 = vadd.f32 %v941, %v971
    %973 = vdwg.mxu0
    %974 = vmatpush.msra.mxu0 0.0
    %975 = vmatpush.msra.mxu0 0.0
    %976 = vmatpush.msra.mxu0 0.0
    %977 = vmatpush.msra.mxu0 0.0
    %978 = vmatpush.msra.mxu0 0.0
    %979 = vmatpush.msra.mxu0 0.0
    %980 = vmatpush.msra.mxu0 0.0
    %981 = vmatpush.msra.mxu0 0.0
    %982 = vmatpush.msra.mxu0 0.0
    %983 = vmatpush.msra.mxu0 0.0
    %984 = vmatpush.msra.mxu0 0.0
    %985 = vmatpush.msra.mxu0 0.0
    %986 = vmatpush.msra.mxu0 0.0
    %987 = vmatpush.msra.mxu0 0.0
    %v988 = vand.u32 %v79, 4294901760
    %989 = vmatpush.msra.mxu0 %v988
    %v990 = vand.u32 %v78, 4294901760
    %991 = vmatpush.msra.mxu0 %v990
    %v992 = vand.u32 %v868, 4294901760
    %v993 = vsub.f32 %v868, %v992
    %v994 = vand.u32 %v993, 4294901760
    %995 = vmatmul.f32.gmra.mxu0 %v994
    %v996 = vpop.f32.mrf.mxu0
    %v997 = vadd.f32 %v967, %v996
    %v998 = vand.u32 %v871, 4294901760
    %v999 = vsub.f32 %v871, %v998
    %v1000 = vand.u32 %v999, 4294901760
    %1001 = vmatmul.f32.gmra.mxu0 %v1000
    %v1002 = vpop.f32.mrf.mxu0
    %v1003 = vadd.f32 %v972, %v1002
    %1004 = vdwg.mxu0
    %1005 = vmatpush.msra.mxu0 0.0
    %1006 = vmatpush.msra.mxu0 0.0
    %1007 = vmatpush.msra.mxu0 0.0
    %1008 = vmatpush.msra.mxu0 0.0
    %1009 = vmatpush.msra.mxu0 0.0
    %1010 = vmatpush.msra.mxu0 0.0
    %1011 = vmatpush.msra.mxu0 0.0
    %1012 = vmatpush.msra.mxu0 0.0
    %1013 = vmatpush.msra.mxu0 0.0
    %1014 = vmatpush.msra.mxu0 0.0
    %1015 = vmatpush.msra.mxu0 0.0
    %1016 = vmatpush.msra.mxu0 0.0
    %1017 = vmatpush.msra.mxu0 0.0
    %1018 = vmatpush.msra.mxu0 0.0
    %v1019 = vand.u32 %v79, 4294901760
    %v1020 = vsub.f32 %v79, %v1019
    %v1021 = vand.u32 %v1020, 4294901760
    %1022 = vmatpush.msra.mxu0 %v1021
    %v1023 = vand.u32 %v78, 4294901760
    %v1024 = vsub.f32 %v78, %v1023
    %v1025 = vand.u32 %v1024, 4294901760
    %1026 = vmatpush.msra.mxu0 %v1025
    %v1027 = vand.u32 %v868, 4294901760
    %1028 = vmatmul.f32.gmra.mxu0 %v1027
    %v1029 = vpop.f32.mrf.mxu0
    %v1030 = vadd.f32 %v997, %v1029
    %v1031 = vand.u32 %v871, 4294901760
    %1032 = vmatmul.f32.gmra.mxu0 %v1031
    %v1033 = vpop.f32.mrf.mxu0
    %v1034 = vadd.f32 %v1003, %v1033
    %1035 = vdwg.mxu0
    %1036 = vmatpush.msra.mxu0 0.0
    %1037 = vmatpush.msra.mxu0 0.0
    %1038 = vmatpush.msra.mxu0 0.0
    %1039 = vmatpush.msra.mxu0 0.0
    %1040 = vmatpush.msra.mxu0 0.0
    %1041 = vmatpush.msra.mxu0 0.0
    %1042 = vmatpush.msra.mxu0 0.0
    %1043 = vmatpush.msra.mxu0 0.0
    %1044 = vmatpush.msra.mxu0 0.0
    %1045 = vmatpush.msra.mxu0 0.0
    %1046 = vmatpush.msra.mxu0 0.0
    %1047 = vmatpush.msra.mxu0 0.0
    %1048 = vmatpush.msra.mxu0 0.0
    %1049 = vmatpush.msra.mxu0 0.0
    %v1050 = vand.u32 %v79, 4294901760
    %1051 = vmatpush.msra.mxu0 %v1050
    %v1052 = vand.u32 %v78, 4294901760
    %1053 = vmatpush.msra.mxu0 %v1052
    %v1054 = vand.u32 %v868, 4294901760
    %1055 = vmatmul.f32.gmra.mxu0 %v1054
    %v1056 = vpop.f32.mrf.mxu0
    %v1057 = vadd.f32 %v1030, %v1056
    %v1058 = vand.u32 %v871, 4294901760
    %1059 = vmatmul.f32.gmra.mxu0 %v1058
    %v1060 = vpop.f32.mrf.mxu0
    %v1061 = vadd.f32 %v1034, %v1060
    %1062 = vdwg.mxu0
    %v1064 = vsel %vm82, %v72, 0
    %v1067 = vsel %vm82, %v73, 0
    %1069 = vmatpush.msra.mxu0 0.0
    %1070 = vmatpush.msra.mxu0 0.0
    %1071 = vmatpush.msra.mxu0 0.0
    %1072 = vmatpush.msra.mxu0 0.0
    %1073 = vmatpush.msra.mxu0 0.0
    %1074 = vmatpush.msra.mxu0 0.0
    %1075 = vmatpush.msra.mxu0 0.0
    %1076 = vmatpush.msra.mxu0 0.0
    %1077 = vmatpush.msra.mxu0 0.0
    %1078 = vmatpush.msra.mxu0 0.0
    %1079 = vmatpush.msra.mxu0 0.0
    %1080 = vmatpush.msra.mxu0 0.0
    %1081 = vmatpush.msra.mxu0 0.0
    %1082 = vmatpush.msra.mxu0 0.0
    %v1083 = vand.u32 %v79, 4294901760
    %1084 = vmatpush.msra.mxu0 %v1083
    %v1085 = vand.u32 %v78, 4294901760
    %1086 = vmatpush.msra.mxu0 %v1085
    %v1087 = vand.u32 %v1064, 4294901760
    %v1088 = vsub.f32 %v1064, %v1087
    %v1089 = vand.u32 %v1088, 4294901760
    %v1090 = vsub.f32 %v1088, %v1089
    %v1091 = vand.u32 %v1090, 4294901760
    %1092 = vmatmul.f32.gmra.mxu0 %v1091
    %v1093 = vpop.f32.mrf.mxu0
    %v1094 = vadd.f32 0.0, %v1093
    %v1095 = vand.u32 %v1067, 4294901760
    %v1096 = vsub.f32 %v1067, %v1095
    %v1097 = vand.u32 %v1096, 4294901760
    %v1098 = vsub.f32 %v1096, %v1097
    %v1099 = vand.u32 %v1098, 4294901760
    %1100 = vmatmul.f32.gmra.mxu0 %v1099
    %v1101 = vpop.f32.mrf.mxu0
    %v1102 = vadd.f32 0.0, %v1101
    %1103 = vdwg.mxu0
    %1104 = vmatpush.msra.mxu0 0.0
    %1105 = vmatpush.msra.mxu0 0.0
    %1106 = vmatpush.msra.mxu0 0.0
    %1107 = vmatpush.msra.mxu0 0.0
    %1108 = vmatpush.msra.mxu0 0.0
    %1109 = vmatpush.msra.mxu0 0.0
    %1110 = vmatpush.msra.mxu0 0.0
    %1111 = vmatpush.msra.mxu0 0.0
    %1112 = vmatpush.msra.mxu0 0.0
    %1113 = vmatpush.msra.mxu0 0.0
    %1114 = vmatpush.msra.mxu0 0.0
    %1115 = vmatpush.msra.mxu0 0.0
    %1116 = vmatpush.msra.mxu0 0.0
    %1117 = vmatpush.msra.mxu0 0.0
    %v1118 = vand.u32 %v79, 4294901760
    %v1119 = vsub.f32 %v79, %v1118
    %v1120 = vand.u32 %v1119, 4294901760
    %v1121 = vsub.f32 %v1119, %v1120
    %v1122 = vand.u32 %v1121, 4294901760
    %1123 = vmatpush.msra.mxu0 %v1122
    %v1124 = vand.u32 %v78, 4294901760
    %v1125 = vsub.f32 %v78, %v1124
    %v1126 = vand.u32 %v1125, 4294901760
    %v1127 = vsub.f32 %v1125, %v1126
    %v1128 = vand.u32 %v1127, 4294901760
    %1129 = vmatpush.msra.mxu0 %v1128
    %v1130 = vand.u32 %v1064, 4294901760
    %1131 = vmatmul.f32.gmra.mxu0 %v1130
    %v1132 = vpop.f32.mrf.mxu0
    %v1133 = vadd.f32 %v1094, %v1132
    %v1134 = vand.u32 %v1067, 4294901760
    %1135 = vmatmul.f32.gmra.mxu0 %v1134
    %v1136 = vpop.f32.mrf.mxu0
    %v1137 = vadd.f32 %v1102, %v1136
    %1138 = vdwg.mxu0
    %1139 = vmatpush.msra.mxu0 0.0
    %1140 = vmatpush.msra.mxu0 0.0
    %1141 = vmatpush.msra.mxu0 0.0
    %1142 = vmatpush.msra.mxu0 0.0
    %1143 = vmatpush.msra.mxu0 0.0
    %1144 = vmatpush.msra.mxu0 0.0
    %1145 = vmatpush.msra.mxu0 0.0
    %1146 = vmatpush.msra.mxu0 0.0
    %1147 = vmatpush.msra.mxu0 0.0
    %1148 = vmatpush.msra.mxu0 0.0
    %1149 = vmatpush.msra.mxu0 0.0
    %1150 = vmatpush.msra.mxu0 0.0
    %1151 = vmatpush.msra.mxu0 0.0
    %1152 = vmatpush.msra.mxu0 0.0
    %v1153 = vand.u32 %v79, 4294901760
    %v1154 = vsub.f32 %v79, %v1153
    %1155 = vmatpush.msra.mxu0 %v1154
    %v1156 = vand.u32 %v78, 4294901760
    %v1157 = vsub.f32 %v78, %v1156
    %1158 = vmatpush.msra.mxu0 %v1157
    %v1159 = vand.u32 %v1064, 4294901760
    %v1160 = vsub.f32 %v1064, %v1159
    %1161 = vmatmul.f32.gmra.mxu0 %v1160
    %v1162 = vpop.f32.mrf.mxu0
    %v1163 = vadd.f32 %v1133, %v1162
    %v1164 = vand.u32 %v1067, 4294901760
    %v1165 = vsub.f32 %v1067, %v1164
    %1166 = vmatmul.f32.gmra.mxu0 %v1165
    %v1167 = vpop.f32.mrf.mxu0
    %v1168 = vadd.f32 %v1137, %v1167
    %1169 = vdwg.mxu0
    %1170 = vmatpush.msra.mxu0 0.0
    %1171 = vmatpush.msra.mxu0 0.0
    %1172 = vmatpush.msra.mxu0 0.0
    %1173 = vmatpush.msra.mxu0 0.0
    %1174 = vmatpush.msra.mxu0 0.0
    %1175 = vmatpush.msra.mxu0 0.0
    %1176 = vmatpush.msra.mxu0 0.0
    %1177 = vmatpush.msra.mxu0 0.0
    %1178 = vmatpush.msra.mxu0 0.0
    %1179 = vmatpush.msra.mxu0 0.0
    %1180 = vmatpush.msra.mxu0 0.0
    %1181 = vmatpush.msra.mxu0 0.0
    %1182 = vmatpush.msra.mxu0 0.0
    %1183 = vmatpush.msra.mxu0 0.0
    %v1184 = vand.u32 %v79, 4294901760
    %1185 = vmatpush.msra.mxu0 %v1184
    %v1186 = vand.u32 %v78, 4294901760
    %1187 = vmatpush.msra.mxu0 %v1186
    %v1188 = vand.u32 %v1064, 4294901760
    %v1189 = vsub.f32 %v1064, %v1188
    %v1190 = vand.u32 %v1189, 4294901760
    %1191 = vmatmul.f32.gmra.mxu0 %v1190
    %v1192 = vpop.f32.mrf.mxu0
    %v1193 = vadd.f32 %v1163, %v1192
    %v1194 = vand.u32 %v1067, 4294901760
    %v1195 = vsub.f32 %v1067, %v1194
    %v1196 = vand.u32 %v1195, 4294901760
    %1197 = vmatmul.f32.gmra.mxu0 %v1196
    %v1198 = vpop.f32.mrf.mxu0
    %v1199 = vadd.f32 %v1168, %v1198
    %1200 = vdwg.mxu0
    %1201 = vmatpush.msra.mxu0 0.0
    %1202 = vmatpush.msra.mxu0 0.0
    %1203 = vmatpush.msra.mxu0 0.0
    %1204 = vmatpush.msra.mxu0 0.0
    %1205 = vmatpush.msra.mxu0 0.0
    %1206 = vmatpush.msra.mxu0 0.0
    %1207 = vmatpush.msra.mxu0 0.0
    %1208 = vmatpush.msra.mxu0 0.0
    %1209 = vmatpush.msra.mxu0 0.0
    %1210 = vmatpush.msra.mxu0 0.0
    %1211 = vmatpush.msra.mxu0 0.0
    %1212 = vmatpush.msra.mxu0 0.0
    %1213 = vmatpush.msra.mxu0 0.0
    %1214 = vmatpush.msra.mxu0 0.0
    %v1215 = vand.u32 %v79, 4294901760
    %v1216 = vsub.f32 %v79, %v1215
    %v1217 = vand.u32 %v1216, 4294901760
    %1218 = vmatpush.msra.mxu0 %v1217
    %v1219 = vand.u32 %v78, 4294901760
    %v1220 = vsub.f32 %v78, %v1219
    %v1221 = vand.u32 %v1220, 4294901760
    %1222 = vmatpush.msra.mxu0 %v1221
    %v1223 = vand.u32 %v1064, 4294901760
    %1224 = vmatmul.f32.gmra.mxu0 %v1223
    %v1225 = vpop.f32.mrf.mxu0
    %v1226 = vadd.f32 %v1193, %v1225
    %v1227 = vand.u32 %v1067, 4294901760
    %1228 = vmatmul.f32.gmra.mxu0 %v1227
    %v1229 = vpop.f32.mrf.mxu0
    %v1230 = vadd.f32 %v1199, %v1229
    %1231 = vdwg.mxu0
    %1232 = vmatpush.msra.mxu0 0.0
    %1233 = vmatpush.msra.mxu0 0.0
    %1234 = vmatpush.msra.mxu0 0.0
    %1235 = vmatpush.msra.mxu0 0.0
    %1236 = vmatpush.msra.mxu0 0.0
    %1237 = vmatpush.msra.mxu0 0.0
    %1238 = vmatpush.msra.mxu0 0.0
    %1239 = vmatpush.msra.mxu0 0.0
    %1240 = vmatpush.msra.mxu0 0.0
    %1241 = vmatpush.msra.mxu0 0.0
    %1242 = vmatpush.msra.mxu0 0.0
    %1243 = vmatpush.msra.mxu0 0.0
    %1244 = vmatpush.msra.mxu0 0.0
    %1245 = vmatpush.msra.mxu0 0.0
    %v1246 = vand.u32 %v79, 4294901760
    %1247 = vmatpush.msra.mxu0 %v1246
    %v1248 = vand.u32 %v78, 4294901760
    %1249 = vmatpush.msra.mxu0 %v1248
    %v1250 = vand.u32 %v1064, 4294901760
    %1251 = vmatmul.f32.gmra.mxu0 %v1250
    %v1252 = vpop.f32.mrf.mxu0
    %v1253 = vadd.f32 %v1226, %v1252
    %v1254 = vand.u32 %v1067, 4294901760
    %1255 = vmatmul.f32.gmra.mxu0 %v1254
    %v1256 = vpop.f32.mrf.mxu0
    %v1257 = vadd.f32 %v1230, %v1256
    %1258 = vdwg.mxu0
    %v1260 = vsel %vm82, %v74, 0
    %v1263 = vsel %vm82, %v75, 0
    %1265 = vmatpush.msra.mxu0 0.0
    %1266 = vmatpush.msra.mxu0 0.0
    %1267 = vmatpush.msra.mxu0 0.0
    %1268 = vmatpush.msra.mxu0 0.0
    %1269 = vmatpush.msra.mxu0 0.0
    %1270 = vmatpush.msra.mxu0 0.0
    %1271 = vmatpush.msra.mxu0 0.0
    %1272 = vmatpush.msra.mxu0 0.0
    %1273 = vmatpush.msra.mxu0 0.0
    %1274 = vmatpush.msra.mxu0 0.0
    %1275 = vmatpush.msra.mxu0 0.0
    %1276 = vmatpush.msra.mxu0 0.0
    %1277 = vmatpush.msra.mxu0 0.0
    %1278 = vmatpush.msra.mxu0 0.0
    %v1279 = vand.u32 %v79, 4294901760
    %1280 = vmatpush.msra.mxu0 %v1279
    %v1281 = vand.u32 %v78, 4294901760
    %1282 = vmatpush.msra.mxu0 %v1281
    %v1283 = vand.u32 %v1260, 4294901760
    %v1284 = vsub.f32 %v1260, %v1283
    %v1285 = vand.u32 %v1284, 4294901760
    %v1286 = vsub.f32 %v1284, %v1285
    %v1287 = vand.u32 %v1286, 4294901760
    %1288 = vmatmul.f32.gmra.mxu0 %v1287
    %v1289 = vpop.f32.mrf.mxu0
    %v1290 = vadd.f32 0.0, %v1289
    %v1291 = vand.u32 %v1263, 4294901760
    %v1292 = vsub.f32 %v1263, %v1291
    %v1293 = vand.u32 %v1292, 4294901760
    %v1294 = vsub.f32 %v1292, %v1293
    %v1295 = vand.u32 %v1294, 4294901760
    %1296 = vmatmul.f32.gmra.mxu0 %v1295
    %v1297 = vpop.f32.mrf.mxu0
    %v1298 = vadd.f32 0.0, %v1297
    %1299 = vdwg.mxu0
    %1300 = vmatpush.msra.mxu0 0.0
    %1301 = vmatpush.msra.mxu0 0.0
    %1302 = vmatpush.msra.mxu0 0.0
    %1303 = vmatpush.msra.mxu0 0.0
    %1304 = vmatpush.msra.mxu0 0.0
    %1305 = vmatpush.msra.mxu0 0.0
    %1306 = vmatpush.msra.mxu0 0.0
    %1307 = vmatpush.msra.mxu0 0.0
    %1308 = vmatpush.msra.mxu0 0.0
    %1309 = vmatpush.msra.mxu0 0.0
    %1310 = vmatpush.msra.mxu0 0.0
    %1311 = vmatpush.msra.mxu0 0.0
    %1312 = vmatpush.msra.mxu0 0.0
    %1313 = vmatpush.msra.mxu0 0.0
    %v1314 = vand.u32 %v79, 4294901760
    %v1315 = vsub.f32 %v79, %v1314
    %v1316 = vand.u32 %v1315, 4294901760
    %v1317 = vsub.f32 %v1315, %v1316
    %v1318 = vand.u32 %v1317, 4294901760
    %1319 = vmatpush.msra.mxu0 %v1318
    %v1320 = vand.u32 %v78, 4294901760
    %v1321 = vsub.f32 %v78, %v1320
    %v1322 = vand.u32 %v1321, 4294901760
    %v1323 = vsub.f32 %v1321, %v1322
    %v1324 = vand.u32 %v1323, 4294901760
    %1325 = vmatpush.msra.mxu0 %v1324
    %v1326 = vand.u32 %v1260, 4294901760
    %1327 = vmatmul.f32.gmra.mxu0 %v1326
    %v1328 = vpop.f32.mrf.mxu0
    %v1329 = vadd.f32 %v1290, %v1328
    %v1330 = vand.u32 %v1263, 4294901760
    %1331 = vmatmul.f32.gmra.mxu0 %v1330
    %v1332 = vpop.f32.mrf.mxu0
    %v1333 = vadd.f32 %v1298, %v1332
    %1334 = vdwg.mxu0
    %1335 = vmatpush.msra.mxu0 0.0
    %1336 = vmatpush.msra.mxu0 0.0
    %1337 = vmatpush.msra.mxu0 0.0
    %1338 = vmatpush.msra.mxu0 0.0
    %1339 = vmatpush.msra.mxu0 0.0
    %1340 = vmatpush.msra.mxu0 0.0
    %1341 = vmatpush.msra.mxu0 0.0
    %1342 = vmatpush.msra.mxu0 0.0
    %1343 = vmatpush.msra.mxu0 0.0
    %1344 = vmatpush.msra.mxu0 0.0
    %1345 = vmatpush.msra.mxu0 0.0
    %1346 = vmatpush.msra.mxu0 0.0
    %1347 = vmatpush.msra.mxu0 0.0
    %1348 = vmatpush.msra.mxu0 0.0
    %v1349 = vand.u32 %v79, 4294901760
    %v1350 = vsub.f32 %v79, %v1349
    %1351 = vmatpush.msra.mxu0 %v1350
    %v1352 = vand.u32 %v78, 4294901760
    %v1353 = vsub.f32 %v78, %v1352
    %1354 = vmatpush.msra.mxu0 %v1353
    %v1355 = vand.u32 %v1260, 4294901760
    %v1356 = vsub.f32 %v1260, %v1355
    %1357 = vmatmul.f32.gmra.mxu0 %v1356
    %v1358 = vpop.f32.mrf.mxu0
    %v1359 = vadd.f32 %v1329, %v1358
    %v1360 = vand.u32 %v1263, 4294901760
    %v1361 = vsub.f32 %v1263, %v1360
    %1362 = vmatmul.f32.gmra.mxu0 %v1361
    %v1363 = vpop.f32.mrf.mxu0
    %v1364 = vadd.f32 %v1333, %v1363
    %1365 = vdwg.mxu0
    %1366 = vmatpush.msra.mxu0 0.0
    %1367 = vmatpush.msra.mxu0 0.0
    %1368 = vmatpush.msra.mxu0 0.0
    %1369 = vmatpush.msra.mxu0 0.0
    %1370 = vmatpush.msra.mxu0 0.0
    %1371 = vmatpush.msra.mxu0 0.0
    %1372 = vmatpush.msra.mxu0 0.0
    %1373 = vmatpush.msra.mxu0 0.0
    %1374 = vmatpush.msra.mxu0 0.0
    %1375 = vmatpush.msra.mxu0 0.0
    %1376 = vmatpush.msra.mxu0 0.0
    %1377 = vmatpush.msra.mxu0 0.0
    %1378 = vmatpush.msra.mxu0 0.0
    %1379 = vmatpush.msra.mxu0 0.0
    %v1380 = vand.u32 %v79, 4294901760
    %1381 = vmatpush.msra.mxu0 %v1380
    %v1382 = vand.u32 %v78, 4294901760
    %1383 = vmatpush.msra.mxu0 %v1382
    %v1384 = vand.u32 %v1260, 4294901760
    %v1385 = vsub.f32 %v1260, %v1384
    %v1386 = vand.u32 %v1385, 4294901760
    %1387 = vmatmul.f32.gmra.mxu0 %v1386
    %v1388 = vpop.f32.mrf.mxu0
    %v1389 = vadd.f32 %v1359, %v1388
    %v1390 = vand.u32 %v1263, 4294901760
    %v1391 = vsub.f32 %v1263, %v1390
    %v1392 = vand.u32 %v1391, 4294901760
    %1393 = vmatmul.f32.gmra.mxu0 %v1392
    %v1394 = vpop.f32.mrf.mxu0
    %v1395 = vadd.f32 %v1364, %v1394
    %1396 = vdwg.mxu0
    %1397 = vmatpush.msra.mxu0 0.0
    %1398 = vmatpush.msra.mxu0 0.0
    %1399 = vmatpush.msra.mxu0 0.0
    %1400 = vmatpush.msra.mxu0 0.0
    %1401 = vmatpush.msra.mxu0 0.0
    %1402 = vmatpush.msra.mxu0 0.0
    %1403 = vmatpush.msra.mxu0 0.0
    %1404 = vmatpush.msra.mxu0 0.0
    %1405 = vmatpush.msra.mxu0 0.0
    %1406 = vmatpush.msra.mxu0 0.0
    %1407 = vmatpush.msra.mxu0 0.0
    %1408 = vmatpush.msra.mxu0 0.0
    %1409 = vmatpush.msra.mxu0 0.0
    %1410 = vmatpush.msra.mxu0 0.0
    %v1411 = vand.u32 %v79, 4294901760
    %v1412 = vsub.f32 %v79, %v1411
    %v1413 = vand.u32 %v1412, 4294901760
    %1414 = vmatpush.msra.mxu0 %v1413
    %v1415 = vand.u32 %v78, 4294901760
    %v1416 = vsub.f32 %v78, %v1415
    %v1417 = vand.u32 %v1416, 4294901760
    %1418 = vmatpush.msra.mxu0 %v1417
    %v1419 = vand.u32 %v1260, 4294901760
    %1420 = vmatmul.f32.gmra.mxu0 %v1419
    %v1421 = vpop.f32.mrf.mxu0
    %v1422 = vadd.f32 %v1389, %v1421
    %v1423 = vand.u32 %v1263, 4294901760
    %1424 = vmatmul.f32.gmra.mxu0 %v1423
    %v1425 = vpop.f32.mrf.mxu0
    %v1426 = vadd.f32 %v1395, %v1425
    %1427 = vdwg.mxu0
    %1428 = vmatpush.msra.mxu0 0.0
    %1429 = vmatpush.msra.mxu0 0.0
    %1430 = vmatpush.msra.mxu0 0.0
    %1431 = vmatpush.msra.mxu0 0.0
    %1432 = vmatpush.msra.mxu0 0.0
    %1433 = vmatpush.msra.mxu0 0.0
    %1434 = vmatpush.msra.mxu0 0.0
    %1435 = vmatpush.msra.mxu0 0.0
    %1436 = vmatpush.msra.mxu0 0.0
    %1437 = vmatpush.msra.mxu0 0.0
    %1438 = vmatpush.msra.mxu0 0.0
    %1439 = vmatpush.msra.mxu0 0.0
    %1440 = vmatpush.msra.mxu0 0.0
    %1441 = vmatpush.msra.mxu0 0.0
    %v1442 = vand.u32 %v79, 4294901760
    %1443 = vmatpush.msra.mxu0 %v1442
    %v1444 = vand.u32 %v78, 4294901760
    %1445 = vmatpush.msra.mxu0 %v1444
    %v1446 = vand.u32 %v1260, 4294901760
    %1447 = vmatmul.f32.gmra.mxu0 %v1446
    %v1448 = vpop.f32.mrf.mxu0
    %v1449 = vadd.f32 %v1422, %v1448
    %v1450 = vand.u32 %v1263, 4294901760
    %1451 = vmatmul.f32.gmra.mxu0 %v1450
    %v1452 = vpop.f32.mrf.mxu0
    %v1453 = vadd.f32 %v1426, %v1452
    %1454 = vdwg.mxu0
    %v1456 = vsel %vm82, %v76, 0
    %v1459 = vsel %vm82, %v77, 0
    %1461 = vmatpush.msra.mxu0 0.0
    %1462 = vmatpush.msra.mxu0 0.0
    %1463 = vmatpush.msra.mxu0 0.0
    %1464 = vmatpush.msra.mxu0 0.0
    %1465 = vmatpush.msra.mxu0 0.0
    %1466 = vmatpush.msra.mxu0 0.0
    %1467 = vmatpush.msra.mxu0 0.0
    %1468 = vmatpush.msra.mxu0 0.0
    %1469 = vmatpush.msra.mxu0 0.0
    %1470 = vmatpush.msra.mxu0 0.0
    %1471 = vmatpush.msra.mxu0 0.0
    %1472 = vmatpush.msra.mxu0 0.0
    %1473 = vmatpush.msra.mxu0 0.0
    %1474 = vmatpush.msra.mxu0 0.0
    %v1475 = vand.u32 %v79, 4294901760
    %1476 = vmatpush.msra.mxu0 %v1475
    %v1477 = vand.u32 %v78, 4294901760
    %1478 = vmatpush.msra.mxu0 %v1477
    %v1479 = vand.u32 %v1456, 4294901760
    %v1480 = vsub.f32 %v1456, %v1479
    %v1481 = vand.u32 %v1480, 4294901760
    %v1482 = vsub.f32 %v1480, %v1481
    %v1483 = vand.u32 %v1482, 4294901760
    %1484 = vmatmul.f32.gmra.mxu0 %v1483
    %v1485 = vpop.f32.mrf.mxu0
    %v1486 = vadd.f32 0.0, %v1485
    %v1487 = vand.u32 %v1459, 4294901760
    %v1488 = vsub.f32 %v1459, %v1487
    %v1489 = vand.u32 %v1488, 4294901760
    %v1490 = vsub.f32 %v1488, %v1489
    %v1491 = vand.u32 %v1490, 4294901760
    %1492 = vmatmul.f32.gmra.mxu0 %v1491
    %v1493 = vpop.f32.mrf.mxu0
    %v1494 = vadd.f32 0.0, %v1493
    %1495 = vdwg.mxu0
    %1496 = vmatpush.msra.mxu0 0.0
    %1497 = vmatpush.msra.mxu0 0.0
    %1498 = vmatpush.msra.mxu0 0.0
    %1499 = vmatpush.msra.mxu0 0.0
    %1500 = vmatpush.msra.mxu0 0.0
    %1501 = vmatpush.msra.mxu0 0.0
    %1502 = vmatpush.msra.mxu0 0.0
    %1503 = vmatpush.msra.mxu0 0.0
    %1504 = vmatpush.msra.mxu0 0.0
    %1505 = vmatpush.msra.mxu0 0.0
    %1506 = vmatpush.msra.mxu0 0.0
    %1507 = vmatpush.msra.mxu0 0.0
    %1508 = vmatpush.msra.mxu0 0.0
    %1509 = vmatpush.msra.mxu0 0.0
    %v1510 = vand.u32 %v79, 4294901760
    %v1511 = vsub.f32 %v79, %v1510
    %v1512 = vand.u32 %v1511, 4294901760
    %v1513 = vsub.f32 %v1511, %v1512
    %v1514 = vand.u32 %v1513, 4294901760
    %1515 = vmatpush.msra.mxu0 %v1514
    %v1516 = vand.u32 %v78, 4294901760
    %v1517 = vsub.f32 %v78, %v1516
    %v1518 = vand.u32 %v1517, 4294901760
    %v1519 = vsub.f32 %v1517, %v1518
    %v1520 = vand.u32 %v1519, 4294901760
    %1521 = vmatpush.msra.mxu0 %v1520
    %v1522 = vand.u32 %v1456, 4294901760
    %1523 = vmatmul.f32.gmra.mxu0 %v1522
    %v1524 = vpop.f32.mrf.mxu0
    %v1525 = vadd.f32 %v1486, %v1524
    %v1526 = vand.u32 %v1459, 4294901760
    %1527 = vmatmul.f32.gmra.mxu0 %v1526
    %v1528 = vpop.f32.mrf.mxu0
    %v1529 = vadd.f32 %v1494, %v1528
    %1530 = vdwg.mxu0
    %1531 = vmatpush.msra.mxu0 0.0
    %1532 = vmatpush.msra.mxu0 0.0
    %1533 = vmatpush.msra.mxu0 0.0
    %1534 = vmatpush.msra.mxu0 0.0
    %1535 = vmatpush.msra.mxu0 0.0
    %1536 = vmatpush.msra.mxu0 0.0
    %1537 = vmatpush.msra.mxu0 0.0
    %1538 = vmatpush.msra.mxu0 0.0
    %1539 = vmatpush.msra.mxu0 0.0
    %1540 = vmatpush.msra.mxu0 0.0
    %1541 = vmatpush.msra.mxu0 0.0
    %1542 = vmatpush.msra.mxu0 0.0
    %1543 = vmatpush.msra.mxu0 0.0
    %1544 = vmatpush.msra.mxu0 0.0
    %v1545 = vand.u32 %v79, 4294901760
    %v1546 = vsub.f32 %v79, %v1545
    %1547 = vmatpush.msra.mxu0 %v1546
    %v1548 = vand.u32 %v78, 4294901760
    %v1549 = vsub.f32 %v78, %v1548
    %1550 = vmatpush.msra.mxu0 %v1549
    %v1551 = vand.u32 %v1456, 4294901760
    %v1552 = vsub.f32 %v1456, %v1551
    %1553 = vmatmul.f32.gmra.mxu0 %v1552
    %v1554 = vpop.f32.mrf.mxu0
    %v1555 = vadd.f32 %v1525, %v1554
    %v1556 = vand.u32 %v1459, 4294901760
    %v1557 = vsub.f32 %v1459, %v1556
    %1558 = vmatmul.f32.gmra.mxu0 %v1557
    %v1559 = vpop.f32.mrf.mxu0
    %v1560 = vadd.f32 %v1529, %v1559
    %1561 = vdwg.mxu0
    %1562 = vmatpush.msra.mxu0 0.0
    %1563 = vmatpush.msra.mxu0 0.0
    %1564 = vmatpush.msra.mxu0 0.0
    %1565 = vmatpush.msra.mxu0 0.0
    %1566 = vmatpush.msra.mxu0 0.0
    %1567 = vmatpush.msra.mxu0 0.0
    %1568 = vmatpush.msra.mxu0 0.0
    %1569 = vmatpush.msra.mxu0 0.0
    %1570 = vmatpush.msra.mxu0 0.0
    %1571 = vmatpush.msra.mxu0 0.0
    %1572 = vmatpush.msra.mxu0 0.0
    %1573 = vmatpush.msra.mxu0 0.0
    %1574 = vmatpush.msra.mxu0 0.0
    %1575 = vmatpush.msra.mxu0 0.0
    %v1576 = vand.u32 %v79, 4294901760
    %1577 = vmatpush.msra.mxu0 %v1576
    %v1578 = vand.u32 %v78, 4294901760
    %1579 = vmatpush.msra.mxu0 %v1578
    %v1580 = vand.u32 %v1456, 4294901760
    %v1581 = vsub.f32 %v1456, %v1580
    %v1582 = vand.u32 %v1581, 4294901760
    %1583 = vmatmul.f32.gmra.mxu0 %v1582
    %v1584 = vpop.f32.mrf.mxu0
    %v1585 = vadd.f32 %v1555, %v1584
    %v1586 = vand.u32 %v1459, 4294901760
    %v1587 = vsub.f32 %v1459, %v1586
    %v1588 = vand.u32 %v1587, 4294901760
    %1589 = vmatmul.f32.gmra.mxu0 %v1588
    %v1590 = vpop.f32.mrf.mxu0
    %v1591 = vadd.f32 %v1560, %v1590
    %1592 = vdwg.mxu0
    %1593 = vmatpush.msra.mxu0 0.0
    %1594 = vmatpush.msra.mxu0 0.0
    %1595 = vmatpush.msra.mxu0 0.0
    %1596 = vmatpush.msra.mxu0 0.0
    %1597 = vmatpush.msra.mxu0 0.0
    %1598 = vmatpush.msra.mxu0 0.0
    %1599 = vmatpush.msra.mxu0 0.0
    %1600 = vmatpush.msra.mxu0 0.0
    %1601 = vmatpush.msra.mxu0 0.0
    %1602 = vmatpush.msra.mxu0 0.0
    %1603 = vmatpush.msra.mxu0 0.0
    %1604 = vmatpush.msra.mxu0 0.0
    %1605 = vmatpush.msra.mxu0 0.0
    %1606 = vmatpush.msra.mxu0 0.0
    %v1607 = vand.u32 %v79, 4294901760
    %v1608 = vsub.f32 %v79, %v1607
    %v1609 = vand.u32 %v1608, 4294901760
    %1610 = vmatpush.msra.mxu0 %v1609
    %v1611 = vand.u32 %v78, 4294901760
    %v1612 = vsub.f32 %v78, %v1611
    %v1613 = vand.u32 %v1612, 4294901760
    %1614 = vmatpush.msra.mxu0 %v1613
    %v1615 = vand.u32 %v1456, 4294901760
    %1616 = vmatmul.f32.gmra.mxu0 %v1615
    %v1617 = vpop.f32.mrf.mxu0
    %v1618 = vadd.f32 %v1585, %v1617
    %v1619 = vand.u32 %v1459, 4294901760
    %1620 = vmatmul.f32.gmra.mxu0 %v1619
    %v1621 = vpop.f32.mrf.mxu0
    %v1622 = vadd.f32 %v1591, %v1621
    %1623 = vdwg.mxu0
    %1624 = vmatpush.msra.mxu0 0.0
    %1625 = vmatpush.msra.mxu0 0.0
    %1626 = vmatpush.msra.mxu0 0.0
    %1627 = vmatpush.msra.mxu0 0.0
    %1628 = vmatpush.msra.mxu0 0.0
    %1629 = vmatpush.msra.mxu0 0.0
    %1630 = vmatpush.msra.mxu0 0.0
    %1631 = vmatpush.msra.mxu0 0.0
    %1632 = vmatpush.msra.mxu0 0.0
    %1633 = vmatpush.msra.mxu0 0.0
    %1634 = vmatpush.msra.mxu0 0.0
    %1635 = vmatpush.msra.mxu0 0.0
    %1636 = vmatpush.msra.mxu0 0.0
    %1637 = vmatpush.msra.mxu0 0.0
    %v1638 = vand.u32 %v79, 4294901760
    %1639 = vmatpush.msra.mxu0 %v1638
    %v1640 = vand.u32 %v78, 4294901760
    %1641 = vmatpush.msra.mxu0 %v1640
    %v1642 = vand.u32 %v1456, 4294901760
    %1643 = vmatmul.f32.gmra.mxu0 %v1642
    %v1644 = vpop.f32.mrf.mxu0
    %v1645 = vadd.f32 %v1618, %v1644
    %v1646 = vand.u32 %v1459, 4294901760
    %1647 = vmatmul.f32.gmra.mxu0 %v1646
    %v1648 = vpop.f32.mrf.mxu0
    %v1649 = vadd.f32 %v1622, %v1648
    %1650 = vdwg.mxu0
    %v1652 = vsel %vm82, %v80, 0
    %v1655 = vsel %vm82, %v81, 0
    %1657 = vmatpush.msra.mxu0 0.0
    %1658 = vmatpush.msra.mxu0 0.0
    %1659 = vmatpush.msra.mxu0 0.0
    %1660 = vmatpush.msra.mxu0 0.0
    %1661 = vmatpush.msra.mxu0 0.0
    %1662 = vmatpush.msra.mxu0 0.0
    %1663 = vmatpush.msra.mxu0 0.0
    %1664 = vmatpush.msra.mxu0 0.0
    %1665 = vmatpush.msra.mxu0 0.0
    %1666 = vmatpush.msra.mxu0 0.0
    %1667 = vmatpush.msra.mxu0 0.0
    %1668 = vmatpush.msra.mxu0 0.0
    %1669 = vmatpush.msra.mxu0 0.0
    %1670 = vmatpush.msra.mxu0 0.0
    %v1671 = vand.u32 %v277, 4294901760
    %1672 = vmatpush.msra.mxu0 %v1671
    %v1673 = vand.u32 %v273, 4294901760
    %1674 = vmatpush.msra.mxu0 %v1673
    %v1675 = vand.u32 %v1652, 4294901760
    %v1676 = vsub.f32 %v1652, %v1675
    %v1677 = vand.u32 %v1676, 4294901760
    %v1678 = vsub.f32 %v1676, %v1677
    %v1679 = vand.u32 %v1678, 4294901760
    %1680 = vmatmul.f32.gmra.mxu0 %v1679
    %v1681 = vpop.f32.mrf.mxu0
    %v1682 = vadd.f32 0.0, %v1681
    %v1683 = vand.u32 %v1655, 4294901760
    %v1684 = vsub.f32 %v1655, %v1683
    %v1685 = vand.u32 %v1684, 4294901760
    %v1686 = vsub.f32 %v1684, %v1685
    %v1687 = vand.u32 %v1686, 4294901760
    %1688 = vmatmul.f32.gmra.mxu0 %v1687
    %v1689 = vpop.f32.mrf.mxu0
    %v1690 = vadd.f32 0.0, %v1689
    %1691 = vdwg.mxu0
    %1692 = vmatpush.msra.mxu0 0.0
    %1693 = vmatpush.msra.mxu0 0.0
    %1694 = vmatpush.msra.mxu0 0.0
    %1695 = vmatpush.msra.mxu0 0.0
    %1696 = vmatpush.msra.mxu0 0.0
    %1697 = vmatpush.msra.mxu0 0.0
    %1698 = vmatpush.msra.mxu0 0.0
    %1699 = vmatpush.msra.mxu0 0.0
    %1700 = vmatpush.msra.mxu0 0.0
    %1701 = vmatpush.msra.mxu0 0.0
    %1702 = vmatpush.msra.mxu0 0.0
    %1703 = vmatpush.msra.mxu0 0.0
    %1704 = vmatpush.msra.mxu0 0.0
    %1705 = vmatpush.msra.mxu0 0.0
    %v1706 = vand.u32 %v277, 4294901760
    %v1707 = vsub.f32 %v277, %v1706
    %v1708 = vand.u32 %v1707, 4294901760
    %v1709 = vsub.f32 %v1707, %v1708
    %v1710 = vand.u32 %v1709, 4294901760
    %1711 = vmatpush.msra.mxu0 %v1710
    %v1712 = vand.u32 %v273, 4294901760
    %v1713 = vsub.f32 %v273, %v1712
    %v1714 = vand.u32 %v1713, 4294901760
    %v1715 = vsub.f32 %v1713, %v1714
    %v1716 = vand.u32 %v1715, 4294901760
    %1717 = vmatpush.msra.mxu0 %v1716
    %v1718 = vand.u32 %v1652, 4294901760
    %1719 = vmatmul.f32.gmra.mxu0 %v1718
    %v1720 = vpop.f32.mrf.mxu0
    %v1721 = vadd.f32 %v1682, %v1720
    %v1722 = vand.u32 %v1655, 4294901760
    %1723 = vmatmul.f32.gmra.mxu0 %v1722
    %v1724 = vpop.f32.mrf.mxu0
    %v1725 = vadd.f32 %v1690, %v1724
    %1726 = vdwg.mxu0
    %1727 = vmatpush.msra.mxu0 0.0
    %1728 = vmatpush.msra.mxu0 0.0
    %1729 = vmatpush.msra.mxu0 0.0
    %1730 = vmatpush.msra.mxu0 0.0
    %1731 = vmatpush.msra.mxu0 0.0
    %1732 = vmatpush.msra.mxu0 0.0
    %1733 = vmatpush.msra.mxu0 0.0
    %1734 = vmatpush.msra.mxu0 0.0
    %1735 = vmatpush.msra.mxu0 0.0
    %1736 = vmatpush.msra.mxu0 0.0
    %1737 = vmatpush.msra.mxu0 0.0
    %1738 = vmatpush.msra.mxu0 0.0
    %1739 = vmatpush.msra.mxu0 0.0
    %1740 = vmatpush.msra.mxu0 0.0
    %v1741 = vand.u32 %v277, 4294901760
    %v1742 = vsub.f32 %v277, %v1741
    %1743 = vmatpush.msra.mxu0 %v1742
    %v1744 = vand.u32 %v273, 4294901760
    %v1745 = vsub.f32 %v273, %v1744
    %1746 = vmatpush.msra.mxu0 %v1745
    %v1747 = vand.u32 %v1652, 4294901760
    %v1748 = vsub.f32 %v1652, %v1747
    %1749 = vmatmul.f32.gmra.mxu0 %v1748
    %v1750 = vpop.f32.mrf.mxu0
    %v1751 = vadd.f32 %v1721, %v1750
    %v1752 = vand.u32 %v1655, 4294901760
    %v1753 = vsub.f32 %v1655, %v1752
    %1754 = vmatmul.f32.gmra.mxu0 %v1753
    %v1755 = vpop.f32.mrf.mxu0
    %v1756 = vadd.f32 %v1725, %v1755
    %1757 = vdwg.mxu0
    %1758 = vmatpush.msra.mxu0 0.0
    %1759 = vmatpush.msra.mxu0 0.0
    %1760 = vmatpush.msra.mxu0 0.0
    %1761 = vmatpush.msra.mxu0 0.0
    %1762 = vmatpush.msra.mxu0 0.0
    %1763 = vmatpush.msra.mxu0 0.0
    %1764 = vmatpush.msra.mxu0 0.0
    %1765 = vmatpush.msra.mxu0 0.0
    %1766 = vmatpush.msra.mxu0 0.0
    %1767 = vmatpush.msra.mxu0 0.0
    %1768 = vmatpush.msra.mxu0 0.0
    %1769 = vmatpush.msra.mxu0 0.0
    %1770 = vmatpush.msra.mxu0 0.0
    %1771 = vmatpush.msra.mxu0 0.0
    %v1772 = vand.u32 %v277, 4294901760
    %1773 = vmatpush.msra.mxu0 %v1772
    %v1774 = vand.u32 %v273, 4294901760
    %1775 = vmatpush.msra.mxu0 %v1774
    %v1776 = vand.u32 %v1652, 4294901760
    %v1777 = vsub.f32 %v1652, %v1776
    %v1778 = vand.u32 %v1777, 4294901760
    %1779 = vmatmul.f32.gmra.mxu0 %v1778
    %v1780 = vpop.f32.mrf.mxu0
    %v1781 = vadd.f32 %v1751, %v1780
    %v1782 = vand.u32 %v1655, 4294901760
    %v1783 = vsub.f32 %v1655, %v1782
    %v1784 = vand.u32 %v1783, 4294901760
    %1785 = vmatmul.f32.gmra.mxu0 %v1784
    %v1786 = vpop.f32.mrf.mxu0
    %v1787 = vadd.f32 %v1756, %v1786
    %1788 = vdwg.mxu0
    %1789 = vmatpush.msra.mxu0 0.0
    %1790 = vmatpush.msra.mxu0 0.0
    %1791 = vmatpush.msra.mxu0 0.0
    %1792 = vmatpush.msra.mxu0 0.0
    %1793 = vmatpush.msra.mxu0 0.0
    %1794 = vmatpush.msra.mxu0 0.0
    %1795 = vmatpush.msra.mxu0 0.0
    %1796 = vmatpush.msra.mxu0 0.0
    %1797 = vmatpush.msra.mxu0 0.0
    %1798 = vmatpush.msra.mxu0 0.0
    %1799 = vmatpush.msra.mxu0 0.0
    %1800 = vmatpush.msra.mxu0 0.0
    %1801 = vmatpush.msra.mxu0 0.0
    %1802 = vmatpush.msra.mxu0 0.0
    %v1803 = vand.u32 %v277, 4294901760
    %v1804 = vsub.f32 %v277, %v1803
    %v1805 = vand.u32 %v1804, 4294901760
    %1806 = vmatpush.msra.mxu0 %v1805
    %v1807 = vand.u32 %v273, 4294901760
    %v1808 = vsub.f32 %v273, %v1807
    %v1809 = vand.u32 %v1808, 4294901760
    %1810 = vmatpush.msra.mxu0 %v1809
    %v1811 = vand.u32 %v1652, 4294901760
    %1812 = vmatmul.f32.gmra.mxu0 %v1811
    %v1813 = vpop.f32.mrf.mxu0
    %v1814 = vadd.f32 %v1781, %v1813
    %v1815 = vand.u32 %v1655, 4294901760
    %1816 = vmatmul.f32.gmra.mxu0 %v1815
    %v1817 = vpop.f32.mrf.mxu0
    %v1818 = vadd.f32 %v1787, %v1817
    %1819 = vdwg.mxu0
    %1820 = vmatpush.msra.mxu0 0.0
    %1821 = vmatpush.msra.mxu0 0.0
    %1822 = vmatpush.msra.mxu0 0.0
    %1823 = vmatpush.msra.mxu0 0.0
    %1824 = vmatpush.msra.mxu0 0.0
    %1825 = vmatpush.msra.mxu0 0.0
    %1826 = vmatpush.msra.mxu0 0.0
    %1827 = vmatpush.msra.mxu0 0.0
    %1828 = vmatpush.msra.mxu0 0.0
    %1829 = vmatpush.msra.mxu0 0.0
    %1830 = vmatpush.msra.mxu0 0.0
    %1831 = vmatpush.msra.mxu0 0.0
    %1832 = vmatpush.msra.mxu0 0.0
    %1833 = vmatpush.msra.mxu0 0.0
    %v1834 = vand.u32 %v277, 4294901760
    %1835 = vmatpush.msra.mxu0 %v1834
    %v1836 = vand.u32 %v273, 4294901760
    %1837 = vmatpush.msra.mxu0 %v1836
    %v1838 = vand.u32 %v1652, 4294901760
    %1839 = vmatmul.f32.gmra.mxu0 %v1838
    %v1840 = vpop.f32.mrf.mxu0
    %v1841 = vadd.f32 %v1814, %v1840
    %v1842 = vand.u32 %v1655, 4294901760
    %1843 = vmatmul.f32.gmra.mxu0 %v1842
    %v1844 = vpop.f32.mrf.mxu0
    %v1845 = vadd.f32 %v1818, %v1844
    %1846 = vdwg.mxu0
    %1847 = vmatpush.msra.mxu0 0.0
    %1848 = vmatpush.msra.mxu0 0.0
    %1849 = vmatpush.msra.mxu0 0.0
    %1850 = vmatpush.msra.mxu0 0.0
    %1851 = vmatpush.msra.mxu0 0.0
    %1852 = vmatpush.msra.mxu0 0.0
    %1853 = vmatpush.msra.mxu0 0.0
    %1854 = vmatpush.msra.mxu0 0.0
    %1855 = vmatpush.msra.mxu0 0.0
    %1856 = vmatpush.msra.mxu0 0.0
    %1857 = vmatpush.msra.mxu0 0.0
    %1858 = vmatpush.msra.mxu0 0.0
    %1859 = vmatpush.msra.mxu0 0.0
    %1860 = vmatpush.msra.mxu0 0.0
    %v1861 = vand.u32 %v473, 4294901760
    %1862 = vmatpush.msra.mxu0 %v1861
    %v1863 = vand.u32 %v469, 4294901760
    %1864 = vmatpush.msra.mxu0 %v1863
    %v1865 = vand.u32 %v1652, 4294901760
    %v1866 = vsub.f32 %v1652, %v1865
    %v1867 = vand.u32 %v1866, 4294901760
    %v1868 = vsub.f32 %v1866, %v1867
    %v1869 = vand.u32 %v1868, 4294901760
    %1870 = vmatmul.f32.gmra.mxu0 %v1869
    %v1871 = vpop.f32.mrf.mxu0
    %v1872 = vadd.f32 0.0, %v1871
    %v1873 = vand.u32 %v1655, 4294901760
    %v1874 = vsub.f32 %v1655, %v1873
    %v1875 = vand.u32 %v1874, 4294901760
    %v1876 = vsub.f32 %v1874, %v1875
    %v1877 = vand.u32 %v1876, 4294901760
    %1878 = vmatmul.f32.gmra.mxu0 %v1877
    %v1879 = vpop.f32.mrf.mxu0
    %v1880 = vadd.f32 0.0, %v1879
    %1881 = vdwg.mxu0
    %1882 = vmatpush.msra.mxu0 0.0
    %1883 = vmatpush.msra.mxu0 0.0
    %1884 = vmatpush.msra.mxu0 0.0
    %1885 = vmatpush.msra.mxu0 0.0
    %1886 = vmatpush.msra.mxu0 0.0
    %1887 = vmatpush.msra.mxu0 0.0
    %1888 = vmatpush.msra.mxu0 0.0
    %1889 = vmatpush.msra.mxu0 0.0
    %1890 = vmatpush.msra.mxu0 0.0
    %1891 = vmatpush.msra.mxu0 0.0
    %1892 = vmatpush.msra.mxu0 0.0
    %1893 = vmatpush.msra.mxu0 0.0
    %1894 = vmatpush.msra.mxu0 0.0
    %1895 = vmatpush.msra.mxu0 0.0
    %v1896 = vand.u32 %v473, 4294901760
    %v1897 = vsub.f32 %v473, %v1896
    %v1898 = vand.u32 %v1897, 4294901760
    %v1899 = vsub.f32 %v1897, %v1898
    %v1900 = vand.u32 %v1899, 4294901760
    %1901 = vmatpush.msra.mxu0 %v1900
    %v1902 = vand.u32 %v469, 4294901760
    %v1903 = vsub.f32 %v469, %v1902
    %v1904 = vand.u32 %v1903, 4294901760
    %v1905 = vsub.f32 %v1903, %v1904
    %v1906 = vand.u32 %v1905, 4294901760
    %1907 = vmatpush.msra.mxu0 %v1906
    %v1908 = vand.u32 %v1652, 4294901760
    %1909 = vmatmul.f32.gmra.mxu0 %v1908
    %v1910 = vpop.f32.mrf.mxu0
    %v1911 = vadd.f32 %v1872, %v1910
    %v1912 = vand.u32 %v1655, 4294901760
    %1913 = vmatmul.f32.gmra.mxu0 %v1912
    %v1914 = vpop.f32.mrf.mxu0
    %v1915 = vadd.f32 %v1880, %v1914
    %1916 = vdwg.mxu0
    %1917 = vmatpush.msra.mxu0 0.0
    %1918 = vmatpush.msra.mxu0 0.0
    %1919 = vmatpush.msra.mxu0 0.0
    %1920 = vmatpush.msra.mxu0 0.0
    %1921 = vmatpush.msra.mxu0 0.0
    %1922 = vmatpush.msra.mxu0 0.0
    %1923 = vmatpush.msra.mxu0 0.0
    %1924 = vmatpush.msra.mxu0 0.0
    %1925 = vmatpush.msra.mxu0 0.0
    %1926 = vmatpush.msra.mxu0 0.0
    %1927 = vmatpush.msra.mxu0 0.0
    %1928 = vmatpush.msra.mxu0 0.0
    %1929 = vmatpush.msra.mxu0 0.0
    %1930 = vmatpush.msra.mxu0 0.0
    %v1931 = vand.u32 %v473, 4294901760
    %v1932 = vsub.f32 %v473, %v1931
    %1933 = vmatpush.msra.mxu0 %v1932
    %v1934 = vand.u32 %v469, 4294901760
    %v1935 = vsub.f32 %v469, %v1934
    %1936 = vmatpush.msra.mxu0 %v1935
    %v1937 = vand.u32 %v1652, 4294901760
    %v1938 = vsub.f32 %v1652, %v1937
    %1939 = vmatmul.f32.gmra.mxu0 %v1938
    %v1940 = vpop.f32.mrf.mxu0
    %v1941 = vadd.f32 %v1911, %v1940
    %v1942 = vand.u32 %v1655, 4294901760
    %v1943 = vsub.f32 %v1655, %v1942
    %1944 = vmatmul.f32.gmra.mxu0 %v1943
    %v1945 = vpop.f32.mrf.mxu0
    %v1946 = vadd.f32 %v1915, %v1945
    %1947 = vdwg.mxu0
    %1948 = vmatpush.msra.mxu0 0.0
    %1949 = vmatpush.msra.mxu0 0.0
    %1950 = vmatpush.msra.mxu0 0.0
    %1951 = vmatpush.msra.mxu0 0.0
    %1952 = vmatpush.msra.mxu0 0.0
    %1953 = vmatpush.msra.mxu0 0.0
    %1954 = vmatpush.msra.mxu0 0.0
    %1955 = vmatpush.msra.mxu0 0.0
    %1956 = vmatpush.msra.mxu0 0.0
    %1957 = vmatpush.msra.mxu0 0.0
    %1958 = vmatpush.msra.mxu0 0.0
    %1959 = vmatpush.msra.mxu0 0.0
    %1960 = vmatpush.msra.mxu0 0.0
    %1961 = vmatpush.msra.mxu0 0.0
    %v1962 = vand.u32 %v473, 4294901760
    %1963 = vmatpush.msra.mxu0 %v1962
    %v1964 = vand.u32 %v469, 4294901760
    %1965 = vmatpush.msra.mxu0 %v1964
    %v1966 = vand.u32 %v1652, 4294901760
    %v1967 = vsub.f32 %v1652, %v1966
    %v1968 = vand.u32 %v1967, 4294901760
    %1969 = vmatmul.f32.gmra.mxu0 %v1968
    %v1970 = vpop.f32.mrf.mxu0
    %v1971 = vadd.f32 %v1941, %v1970
    %v1972 = vand.u32 %v1655, 4294901760
    %v1973 = vsub.f32 %v1655, %v1972
    %v1974 = vand.u32 %v1973, 4294901760
    %1975 = vmatmul.f32.gmra.mxu0 %v1974
    %v1976 = vpop.f32.mrf.mxu0
    %v1977 = vadd.f32 %v1946, %v1976
    %1978 = vdwg.mxu0
    %1979 = vmatpush.msra.mxu0 0.0
    %1980 = vmatpush.msra.mxu0 0.0
    %1981 = vmatpush.msra.mxu0 0.0
    %1982 = vmatpush.msra.mxu0 0.0
    %1983 = vmatpush.msra.mxu0 0.0
    %1984 = vmatpush.msra.mxu0 0.0
    %1985 = vmatpush.msra.mxu0 0.0
    %1986 = vmatpush.msra.mxu0 0.0
    %1987 = vmatpush.msra.mxu0 0.0
    %1988 = vmatpush.msra.mxu0 0.0
    %1989 = vmatpush.msra.mxu0 0.0
    %1990 = vmatpush.msra.mxu0 0.0
    %1991 = vmatpush.msra.mxu0 0.0
    %1992 = vmatpush.msra.mxu0 0.0
    %v1993 = vand.u32 %v473, 4294901760
    %v1994 = vsub.f32 %v473, %v1993
    %v1995 = vand.u32 %v1994, 4294901760
    %1996 = vmatpush.msra.mxu0 %v1995
    %v1997 = vand.u32 %v469, 4294901760
    %v1998 = vsub.f32 %v469, %v1997
    %v1999 = vand.u32 %v1998, 4294901760
    %2000 = vmatpush.msra.mxu0 %v1999
    %v2001 = vand.u32 %v1652, 4294901760
    %2002 = vmatmul.f32.gmra.mxu0 %v2001
    %v2003 = vpop.f32.mrf.mxu0
    %v2004 = vadd.f32 %v1971, %v2003
    %v2005 = vand.u32 %v1655, 4294901760
    %2006 = vmatmul.f32.gmra.mxu0 %v2005
    %v2007 = vpop.f32.mrf.mxu0
    %v2008 = vadd.f32 %v1977, %v2007
    %2009 = vdwg.mxu0
    %2010 = vmatpush.msra.mxu0 0.0
    %2011 = vmatpush.msra.mxu0 0.0
    %2012 = vmatpush.msra.mxu0 0.0
    %2013 = vmatpush.msra.mxu0 0.0
    %2014 = vmatpush.msra.mxu0 0.0
    %2015 = vmatpush.msra.mxu0 0.0
    %2016 = vmatpush.msra.mxu0 0.0
    %2017 = vmatpush.msra.mxu0 0.0
    %2018 = vmatpush.msra.mxu0 0.0
    %2019 = vmatpush.msra.mxu0 0.0
    %2020 = vmatpush.msra.mxu0 0.0
    %2021 = vmatpush.msra.mxu0 0.0
    %2022 = vmatpush.msra.mxu0 0.0
    %2023 = vmatpush.msra.mxu0 0.0
    %v2024 = vand.u32 %v473, 4294901760
    %2025 = vmatpush.msra.mxu0 %v2024
    %v2026 = vand.u32 %v469, 4294901760
    %2027 = vmatpush.msra.mxu0 %v2026
    %v2028 = vand.u32 %v1652, 4294901760
    %2029 = vmatmul.f32.gmra.mxu0 %v2028
    %v2030 = vpop.f32.mrf.mxu0
    %v2031 = vadd.f32 %v2004, %v2030
    %v2032 = vand.u32 %v1655, 4294901760
    %2033 = vmatmul.f32.gmra.mxu0 %v2032
    %v2034 = vpop.f32.mrf.mxu0
    %v2035 = vadd.f32 %v2008, %v2034
    %2036 = vdwg.mxu0
    %2037 = vmatpush.msra.mxu0 0.0
    %2038 = vmatpush.msra.mxu0 0.0
    %2039 = vmatpush.msra.mxu0 0.0
    %2040 = vmatpush.msra.mxu0 0.0
    %2041 = vmatpush.msra.mxu0 0.0
    %2042 = vmatpush.msra.mxu0 0.0
    %2043 = vmatpush.msra.mxu0 0.0
    %2044 = vmatpush.msra.mxu0 0.0
    %2045 = vmatpush.msra.mxu0 0.0
    %2046 = vmatpush.msra.mxu0 0.0
    %2047 = vmatpush.msra.mxu0 0.0
    %2048 = vmatpush.msra.mxu0 0.0
    %2049 = vmatpush.msra.mxu0 0.0
    %2050 = vmatpush.msra.mxu0 0.0
    %v2051 = vand.u32 %v669, 4294901760
    %2052 = vmatpush.msra.mxu0 %v2051
    %v2053 = vand.u32 %v665, 4294901760
    %2054 = vmatpush.msra.mxu0 %v2053
    %v2055 = vand.u32 %v1652, 4294901760
    %v2056 = vsub.f32 %v1652, %v2055
    %v2057 = vand.u32 %v2056, 4294901760
    %v2058 = vsub.f32 %v2056, %v2057
    %v2059 = vand.u32 %v2058, 4294901760
    %2060 = vmatmul.f32.gmra.mxu0 %v2059
    %v2061 = vpop.f32.mrf.mxu0
    %v2062 = vadd.f32 0.0, %v2061
    %v2063 = vand.u32 %v1655, 4294901760
    %v2064 = vsub.f32 %v1655, %v2063
    %v2065 = vand.u32 %v2064, 4294901760
    %v2066 = vsub.f32 %v2064, %v2065
    %v2067 = vand.u32 %v2066, 4294901760
    %2068 = vmatmul.f32.gmra.mxu0 %v2067
    %v2069 = vpop.f32.mrf.mxu0
    %v2070 = vadd.f32 0.0, %v2069
    %2071 = vdwg.mxu0
    %2072 = vmatpush.msra.mxu0 0.0
    %2073 = vmatpush.msra.mxu0 0.0
    %2074 = vmatpush.msra.mxu0 0.0
    %2075 = vmatpush.msra.mxu0 0.0
    %2076 = vmatpush.msra.mxu0 0.0
    %2077 = vmatpush.msra.mxu0 0.0
    %2078 = vmatpush.msra.mxu0 0.0
    %2079 = vmatpush.msra.mxu0 0.0
    %2080 = vmatpush.msra.mxu0 0.0
    %2081 = vmatpush.msra.mxu0 0.0
    %2082 = vmatpush.msra.mxu0 0.0
    %2083 = vmatpush.msra.mxu0 0.0
    %2084 = vmatpush.msra.mxu0 0.0
    %2085 = vmatpush.msra.mxu0 0.0
    %v2086 = vand.u32 %v669, 4294901760
    %v2087 = vsub.f32 %v669, %v2086
    %v2088 = vand.u32 %v2087, 4294901760
    %v2089 = vsub.f32 %v2087, %v2088
    %v2090 = vand.u32 %v2089, 4294901760
    %2091 = vmatpush.msra.mxu0 %v2090
    %v2092 = vand.u32 %v665, 4294901760
    %v2093 = vsub.f32 %v665, %v2092
    %v2094 = vand.u32 %v2093, 4294901760
    %v2095 = vsub.f32 %v2093, %v2094
    %v2096 = vand.u32 %v2095, 4294901760
    %2097 = vmatpush.msra.mxu0 %v2096
    %v2098 = vand.u32 %v1652, 4294901760
    %2099 = vmatmul.f32.gmra.mxu0 %v2098
    %v2100 = vpop.f32.mrf.mxu0
    %v2101 = vadd.f32 %v2062, %v2100
    %v2102 = vand.u32 %v1655, 4294901760
    %2103 = vmatmul.f32.gmra.mxu0 %v2102
    %v2104 = vpop.f32.mrf.mxu0
    %v2105 = vadd.f32 %v2070, %v2104
    %2106 = vdwg.mxu0
    %2107 = vmatpush.msra.mxu0 0.0
    %2108 = vmatpush.msra.mxu0 0.0
    %2109 = vmatpush.msra.mxu0 0.0
    %2110 = vmatpush.msra.mxu0 0.0
    %2111 = vmatpush.msra.mxu0 0.0
    %2112 = vmatpush.msra.mxu0 0.0
    %2113 = vmatpush.msra.mxu0 0.0
    %2114 = vmatpush.msra.mxu0 0.0
    %2115 = vmatpush.msra.mxu0 0.0
    %2116 = vmatpush.msra.mxu0 0.0
    %2117 = vmatpush.msra.mxu0 0.0
    %2118 = vmatpush.msra.mxu0 0.0
    %2119 = vmatpush.msra.mxu0 0.0
    %2120 = vmatpush.msra.mxu0 0.0
    %v2121 = vand.u32 %v669, 4294901760
    %v2122 = vsub.f32 %v669, %v2121
    %2123 = vmatpush.msra.mxu0 %v2122
    %v2124 = vand.u32 %v665, 4294901760
    %v2125 = vsub.f32 %v665, %v2124
    %2126 = vmatpush.msra.mxu0 %v2125
    %v2127 = vand.u32 %v1652, 4294901760
    %v2128 = vsub.f32 %v1652, %v2127
    %2129 = vmatmul.f32.gmra.mxu0 %v2128
    %v2130 = vpop.f32.mrf.mxu0
    %v2131 = vadd.f32 %v2101, %v2130
    %v2132 = vand.u32 %v1655, 4294901760
    %v2133 = vsub.f32 %v1655, %v2132
    %2134 = vmatmul.f32.gmra.mxu0 %v2133
    %v2135 = vpop.f32.mrf.mxu0
    %v2136 = vadd.f32 %v2105, %v2135
    %2137 = vdwg.mxu0
    %2138 = vmatpush.msra.mxu0 0.0
    %2139 = vmatpush.msra.mxu0 0.0
    %2140 = vmatpush.msra.mxu0 0.0
    %2141 = vmatpush.msra.mxu0 0.0
    %2142 = vmatpush.msra.mxu0 0.0
    %2143 = vmatpush.msra.mxu0 0.0
    %2144 = vmatpush.msra.mxu0 0.0
    %2145 = vmatpush.msra.mxu0 0.0
    %2146 = vmatpush.msra.mxu0 0.0
    %2147 = vmatpush.msra.mxu0 0.0
    %2148 = vmatpush.msra.mxu0 0.0
    %2149 = vmatpush.msra.mxu0 0.0
    %2150 = vmatpush.msra.mxu0 0.0
    %2151 = vmatpush.msra.mxu0 0.0
    %v2152 = vand.u32 %v669, 4294901760
    %2153 = vmatpush.msra.mxu0 %v2152
    %v2154 = vand.u32 %v665, 4294901760
    %2155 = vmatpush.msra.mxu0 %v2154
    %v2156 = vand.u32 %v1652, 4294901760
    %v2157 = vsub.f32 %v1652, %v2156
    %v2158 = vand.u32 %v2157, 4294901760
    %2159 = vmatmul.f32.gmra.mxu0 %v2158
    %v2160 = vpop.f32.mrf.mxu0
    %v2161 = vadd.f32 %v2131, %v2160
    %v2162 = vand.u32 %v1655, 4294901760
    %v2163 = vsub.f32 %v1655, %v2162
    %v2164 = vand.u32 %v2163, 4294901760
    %2165 = vmatmul.f32.gmra.mxu0 %v2164
    %v2166 = vpop.f32.mrf.mxu0
    %v2167 = vadd.f32 %v2136, %v2166
    %2168 = vdwg.mxu0
    %2169 = vmatpush.msra.mxu0 0.0
    %2170 = vmatpush.msra.mxu0 0.0
    %2171 = vmatpush.msra.mxu0 0.0
    %2172 = vmatpush.msra.mxu0 0.0
    %2173 = vmatpush.msra.mxu0 0.0
    %2174 = vmatpush.msra.mxu0 0.0
    %2175 = vmatpush.msra.mxu0 0.0
    %2176 = vmatpush.msra.mxu0 0.0
    %2177 = vmatpush.msra.mxu0 0.0
    %2178 = vmatpush.msra.mxu0 0.0
    %2179 = vmatpush.msra.mxu0 0.0
    %2180 = vmatpush.msra.mxu0 0.0
    %2181 = vmatpush.msra.mxu0 0.0
    %2182 = vmatpush.msra.mxu0 0.0
    %v2183 = vand.u32 %v669, 4294901760
    %v2184 = vsub.f32 %v669, %v2183
    %v2185 = vand.u32 %v2184, 4294901760
    %2186 = vmatpush.msra.mxu0 %v2185
    %v2187 = vand.u32 %v665, 4294901760
    %v2188 = vsub.f32 %v665, %v2187
    %v2189 = vand.u32 %v2188, 4294901760
    %2190 = vmatpush.msra.mxu0 %v2189
    %v2191 = vand.u32 %v1652, 4294901760
    %2192 = vmatmul.f32.gmra.mxu0 %v2191
    %v2193 = vpop.f32.mrf.mxu0
    %v2194 = vadd.f32 %v2161, %v2193
    %v2195 = vand.u32 %v1655, 4294901760
    %2196 = vmatmul.f32.gmra.mxu0 %v2195
    %v2197 = vpop.f32.mrf.mxu0
    %v2198 = vadd.f32 %v2167, %v2197
    %2199 = vdwg.mxu0
    %2200 = vmatpush.msra.mxu0 0.0
    %2201 = vmatpush.msra.mxu0 0.0
    %2202 = vmatpush.msra.mxu0 0.0
    %2203 = vmatpush.msra.mxu0 0.0
    %2204 = vmatpush.msra.mxu0 0.0
    %2205 = vmatpush.msra.mxu0 0.0
    %2206 = vmatpush.msra.mxu0 0.0
    %2207 = vmatpush.msra.mxu0 0.0
    %2208 = vmatpush.msra.mxu0 0.0
    %2209 = vmatpush.msra.mxu0 0.0
    %2210 = vmatpush.msra.mxu0 0.0
    %2211 = vmatpush.msra.mxu0 0.0
    %2212 = vmatpush.msra.mxu0 0.0
    %2213 = vmatpush.msra.mxu0 0.0
    %v2214 = vand.u32 %v669, 4294901760
    %2215 = vmatpush.msra.mxu0 %v2214
    %v2216 = vand.u32 %v665, 4294901760
    %2217 = vmatpush.msra.mxu0 %v2216
    %v2218 = vand.u32 %v1652, 4294901760
    %2219 = vmatmul.f32.gmra.mxu0 %v2218
    %v2220 = vpop.f32.mrf.mxu0
    %v2221 = vadd.f32 %v2194, %v2220
    %v2222 = vand.u32 %v1655, 4294901760
    %2223 = vmatmul.f32.gmra.mxu0 %v2222
    %v2224 = vpop.f32.mrf.mxu0
    %v2225 = vadd.f32 %v2198, %v2224
    %2226 = vdwg.mxu0
    %2227 = vmatpush.msra.mxu0 0.0
    %2228 = vmatpush.msra.mxu0 0.0
    %2229 = vmatpush.msra.mxu0 0.0
    %2230 = vmatpush.msra.mxu0 0.0
    %2231 = vmatpush.msra.mxu0 0.0
    %2232 = vmatpush.msra.mxu0 0.0
    %2233 = vmatpush.msra.mxu0 0.0
    %2234 = vmatpush.msra.mxu0 0.0
    %2235 = vmatpush.msra.mxu0 0.0
    %2236 = vmatpush.msra.mxu0 0.0
    %2237 = vmatpush.msra.mxu0 0.0
    %2238 = vmatpush.msra.mxu0 0.0
    %2239 = vmatpush.msra.mxu0 0.0
    %2240 = vmatpush.msra.mxu0 0.0
    %v2241 = vand.u32 %v865, 4294901760
    %2242 = vmatpush.msra.mxu0 %v2241
    %v2243 = vand.u32 %v861, 4294901760
    %2244 = vmatpush.msra.mxu0 %v2243
    %v2245 = vand.u32 %v1652, 4294901760
    %v2246 = vsub.f32 %v1652, %v2245
    %v2247 = vand.u32 %v2246, 4294901760
    %v2248 = vsub.f32 %v2246, %v2247
    %v2249 = vand.u32 %v2248, 4294901760
    %2250 = vmatmul.f32.gmra.mxu0 %v2249
    %v2251 = vpop.f32.mrf.mxu0
    %v2252 = vadd.f32 0.0, %v2251
    %v2253 = vand.u32 %v1655, 4294901760
    %v2254 = vsub.f32 %v1655, %v2253
    %v2255 = vand.u32 %v2254, 4294901760
    %v2256 = vsub.f32 %v2254, %v2255
    %v2257 = vand.u32 %v2256, 4294901760
    %2258 = vmatmul.f32.gmra.mxu0 %v2257
    %v2259 = vpop.f32.mrf.mxu0
    %v2260 = vadd.f32 0.0, %v2259
    %2261 = vdwg.mxu0
    %2262 = vmatpush.msra.mxu0 0.0
    %2263 = vmatpush.msra.mxu0 0.0
    %2264 = vmatpush.msra.mxu0 0.0
    %2265 = vmatpush.msra.mxu0 0.0
    %2266 = vmatpush.msra.mxu0 0.0
    %2267 = vmatpush.msra.mxu0 0.0
    %2268 = vmatpush.msra.mxu0 0.0
    %2269 = vmatpush.msra.mxu0 0.0
    %2270 = vmatpush.msra.mxu0 0.0
    %2271 = vmatpush.msra.mxu0 0.0
    %2272 = vmatpush.msra.mxu0 0.0
    %2273 = vmatpush.msra.mxu0 0.0
    %2274 = vmatpush.msra.mxu0 0.0
    %2275 = vmatpush.msra.mxu0 0.0
    %v2276 = vand.u32 %v865, 4294901760
    %v2277 = vsub.f32 %v865, %v2276
    %v2278 = vand.u32 %v2277, 4294901760
    %v2279 = vsub.f32 %v2277, %v2278
    %v2280 = vand.u32 %v2279, 4294901760
    %2281 = vmatpush.msra.mxu0 %v2280
    %v2282 = vand.u32 %v861, 4294901760
    %v2283 = vsub.f32 %v861, %v2282
    %v2284 = vand.u32 %v2283, 4294901760
    %v2285 = vsub.f32 %v2283, %v2284
    %v2286 = vand.u32 %v2285, 4294901760
    %2287 = vmatpush.msra.mxu0 %v2286
    %v2288 = vand.u32 %v1652, 4294901760
    %2289 = vmatmul.f32.gmra.mxu0 %v2288
    %v2290 = vpop.f32.mrf.mxu0
    %v2291 = vadd.f32 %v2252, %v2290
    %v2292 = vand.u32 %v1655, 4294901760
    %2293 = vmatmul.f32.gmra.mxu0 %v2292
    %v2294 = vpop.f32.mrf.mxu0
    %v2295 = vadd.f32 %v2260, %v2294
    %2296 = vdwg.mxu0
    %2297 = vmatpush.msra.mxu0 0.0
    %2298 = vmatpush.msra.mxu0 0.0
    %2299 = vmatpush.msra.mxu0 0.0
    %2300 = vmatpush.msra.mxu0 0.0
    %2301 = vmatpush.msra.mxu0 0.0
    %2302 = vmatpush.msra.mxu0 0.0
    %2303 = vmatpush.msra.mxu0 0.0
    %2304 = vmatpush.msra.mxu0 0.0
    %2305 = vmatpush.msra.mxu0 0.0
    %2306 = vmatpush.msra.mxu0 0.0
    %2307 = vmatpush.msra.mxu0 0.0
    %2308 = vmatpush.msra.mxu0 0.0
    %2309 = vmatpush.msra.mxu0 0.0
    %2310 = vmatpush.msra.mxu0 0.0
    %v2311 = vand.u32 %v865, 4294901760
    %v2312 = vsub.f32 %v865, %v2311
    %2313 = vmatpush.msra.mxu0 %v2312
    %v2314 = vand.u32 %v861, 4294901760
    %v2315 = vsub.f32 %v861, %v2314
    %2316 = vmatpush.msra.mxu0 %v2315
    %v2317 = vand.u32 %v1652, 4294901760
    %v2318 = vsub.f32 %v1652, %v2317
    %2319 = vmatmul.f32.gmra.mxu0 %v2318
    %v2320 = vpop.f32.mrf.mxu0
    %v2321 = vadd.f32 %v2291, %v2320
    %v2322 = vand.u32 %v1655, 4294901760
    %v2323 = vsub.f32 %v1655, %v2322
    %2324 = vmatmul.f32.gmra.mxu0 %v2323
    %v2325 = vpop.f32.mrf.mxu0
    %v2326 = vadd.f32 %v2295, %v2325
    %2327 = vdwg.mxu0
    %2328 = vmatpush.msra.mxu0 0.0
    %2329 = vmatpush.msra.mxu0 0.0
    %2330 = vmatpush.msra.mxu0 0.0
    %2331 = vmatpush.msra.mxu0 0.0
    %2332 = vmatpush.msra.mxu0 0.0
    %2333 = vmatpush.msra.mxu0 0.0
    %2334 = vmatpush.msra.mxu0 0.0
    %2335 = vmatpush.msra.mxu0 0.0
    %2336 = vmatpush.msra.mxu0 0.0
    %2337 = vmatpush.msra.mxu0 0.0
    %2338 = vmatpush.msra.mxu0 0.0
    %2339 = vmatpush.msra.mxu0 0.0
    %2340 = vmatpush.msra.mxu0 0.0
    %2341 = vmatpush.msra.mxu0 0.0
    %v2342 = vand.u32 %v865, 4294901760
    %2343 = vmatpush.msra.mxu0 %v2342
    %v2344 = vand.u32 %v861, 4294901760
    %2345 = vmatpush.msra.mxu0 %v2344
    %v2346 = vand.u32 %v1652, 4294901760
    %v2347 = vsub.f32 %v1652, %v2346
    %v2348 = vand.u32 %v2347, 4294901760
    %2349 = vmatmul.f32.gmra.mxu0 %v2348
    %v2350 = vpop.f32.mrf.mxu0
    %v2351 = vadd.f32 %v2321, %v2350
    %v2352 = vand.u32 %v1655, 4294901760
    %v2353 = vsub.f32 %v1655, %v2352
    %v2354 = vand.u32 %v2353, 4294901760
    %2355 = vmatmul.f32.gmra.mxu0 %v2354
    %v2356 = vpop.f32.mrf.mxu0
    %v2357 = vadd.f32 %v2326, %v2356
    %2358 = vdwg.mxu0
    %2359 = vmatpush.msra.mxu0 0.0
    %2360 = vmatpush.msra.mxu0 0.0
    %2361 = vmatpush.msra.mxu0 0.0
    %2362 = vmatpush.msra.mxu0 0.0
    %2363 = vmatpush.msra.mxu0 0.0
    %2364 = vmatpush.msra.mxu0 0.0
    %2365 = vmatpush.msra.mxu0 0.0
    %2366 = vmatpush.msra.mxu0 0.0
    %2367 = vmatpush.msra.mxu0 0.0
    %2368 = vmatpush.msra.mxu0 0.0
    %2369 = vmatpush.msra.mxu0 0.0
    %2370 = vmatpush.msra.mxu0 0.0
    %2371 = vmatpush.msra.mxu0 0.0
    %2372 = vmatpush.msra.mxu0 0.0
    %v2373 = vand.u32 %v865, 4294901760
    %v2374 = vsub.f32 %v865, %v2373
    %v2375 = vand.u32 %v2374, 4294901760
    %2376 = vmatpush.msra.mxu0 %v2375
    %v2377 = vand.u32 %v861, 4294901760
    %v2378 = vsub.f32 %v861, %v2377
    %v2379 = vand.u32 %v2378, 4294901760
    %2380 = vmatpush.msra.mxu0 %v2379
    %v2381 = vand.u32 %v1652, 4294901760
    %2382 = vmatmul.f32.gmra.mxu0 %v2381
    %v2383 = vpop.f32.mrf.mxu0
    %v2384 = vadd.f32 %v2351, %v2383
    %v2385 = vand.u32 %v1655, 4294901760
    %2386 = vmatmul.f32.gmra.mxu0 %v2385
    %v2387 = vpop.f32.mrf.mxu0
    %v2388 = vadd.f32 %v2357, %v2387
    %2389 = vdwg.mxu0
    %2390 = vmatpush.msra.mxu0 0.0
    %2391 = vmatpush.msra.mxu0 0.0
    %2392 = vmatpush.msra.mxu0 0.0
    %2393 = vmatpush.msra.mxu0 0.0
    %2394 = vmatpush.msra.mxu0 0.0
    %2395 = vmatpush.msra.mxu0 0.0
    %2396 = vmatpush.msra.mxu0 0.0
    %2397 = vmatpush.msra.mxu0 0.0
    %2398 = vmatpush.msra.mxu0 0.0
    %2399 = vmatpush.msra.mxu0 0.0
    %2400 = vmatpush.msra.mxu0 0.0
    %2401 = vmatpush.msra.mxu0 0.0
    %2402 = vmatpush.msra.mxu0 0.0
    %2403 = vmatpush.msra.mxu0 0.0
    %v2404 = vand.u32 %v865, 4294901760
    %2405 = vmatpush.msra.mxu0 %v2404
    %v2406 = vand.u32 %v861, 4294901760
    %2407 = vmatpush.msra.mxu0 %v2406
    %v2408 = vand.u32 %v1652, 4294901760
    %2409 = vmatmul.f32.gmra.mxu0 %v2408
    %v2410 = vpop.f32.mrf.mxu0
    %v2411 = vadd.f32 %v2384, %v2410
    %v2412 = vand.u32 %v1655, 4294901760
    %2413 = vmatmul.f32.gmra.mxu0 %v2412
    %v2414 = vpop.f32.mrf.mxu0
    %v2415 = vadd.f32 %v2388, %v2414
    %2416 = vdwg.mxu0
    %2417 = vmatpush.msra.mxu0 0.0
    %2418 = vmatpush.msra.mxu0 0.0
    %2419 = vmatpush.msra.mxu0 0.0
    %2420 = vmatpush.msra.mxu0 0.0
    %2421 = vmatpush.msra.mxu0 0.0
    %2422 = vmatpush.msra.mxu0 0.0
    %2423 = vmatpush.msra.mxu0 0.0
    %2424 = vmatpush.msra.mxu0 0.0
    %2425 = vmatpush.msra.mxu0 0.0
    %2426 = vmatpush.msra.mxu0 0.0
    %2427 = vmatpush.msra.mxu0 0.0
    %2428 = vmatpush.msra.mxu0 0.0
    %2429 = vmatpush.msra.mxu0 0.0
    %2430 = vmatpush.msra.mxu0 0.0
    %v2431 = vand.u32 %v1061, 4294901760
    %2432 = vmatpush.msra.mxu0 %v2431
    %v2433 = vand.u32 %v1057, 4294901760
    %2434 = vmatpush.msra.mxu0 %v2433
    %v2435 = vand.u32 %v1652, 4294901760
    %v2436 = vsub.f32 %v1652, %v2435
    %v2437 = vand.u32 %v2436, 4294901760
    %v2438 = vsub.f32 %v2436, %v2437
    %v2439 = vand.u32 %v2438, 4294901760
    %2440 = vmatmul.f32.gmra.mxu0 %v2439
    %v2441 = vpop.f32.mrf.mxu0
    %v2442 = vadd.f32 0.0, %v2441
    %v2443 = vand.u32 %v1655, 4294901760
    %v2444 = vsub.f32 %v1655, %v2443
    %v2445 = vand.u32 %v2444, 4294901760
    %v2446 = vsub.f32 %v2444, %v2445
    %v2447 = vand.u32 %v2446, 4294901760
    %2448 = vmatmul.f32.gmra.mxu0 %v2447
    %v2449 = vpop.f32.mrf.mxu0
    %v2450 = vadd.f32 0.0, %v2449
    %2451 = vdwg.mxu0
    %2452 = vmatpush.msra.mxu0 0.0
    %2453 = vmatpush.msra.mxu0 0.0
    %2454 = vmatpush.msra.mxu0 0.0
    %2455 = vmatpush.msra.mxu0 0.0
    %2456 = vmatpush.msra.mxu0 0.0
    %2457 = vmatpush.msra.mxu0 0.0
    %2458 = vmatpush.msra.mxu0 0.0
    %2459 = vmatpush.msra.mxu0 0.0
    %2460 = vmatpush.msra.mxu0 0.0
    %2461 = vmatpush.msra.mxu0 0.0
    %2462 = vmatpush.msra.mxu0 0.0
    %2463 = vmatpush.msra.mxu0 0.0
    %2464 = vmatpush.msra.mxu0 0.0
    %2465 = vmatpush.msra.mxu0 0.0
    %v2466 = vand.u32 %v1061, 4294901760
    %v2467 = vsub.f32 %v1061, %v2466
    %v2468 = vand.u32 %v2467, 4294901760
    %v2469 = vsub.f32 %v2467, %v2468
    %v2470 = vand.u32 %v2469, 4294901760
    %2471 = vmatpush.msra.mxu0 %v2470
    %v2472 = vand.u32 %v1057, 4294901760
    %v2473 = vsub.f32 %v1057, %v2472
    %v2474 = vand.u32 %v2473, 4294901760
    %v2475 = vsub.f32 %v2473, %v2474
    %v2476 = vand.u32 %v2475, 4294901760
    %2477 = vmatpush.msra.mxu0 %v2476
    %v2478 = vand.u32 %v1652, 4294901760
    %2479 = vmatmul.f32.gmra.mxu0 %v2478
    %v2480 = vpop.f32.mrf.mxu0
    %v2481 = vadd.f32 %v2442, %v2480
    %v2482 = vand.u32 %v1655, 4294901760
    %2483 = vmatmul.f32.gmra.mxu0 %v2482
    %v2484 = vpop.f32.mrf.mxu0
    %v2485 = vadd.f32 %v2450, %v2484
    %2486 = vdwg.mxu0
    %2487 = vmatpush.msra.mxu0 0.0
    %2488 = vmatpush.msra.mxu0 0.0
    %2489 = vmatpush.msra.mxu0 0.0
    %2490 = vmatpush.msra.mxu0 0.0
    %2491 = vmatpush.msra.mxu0 0.0
    %2492 = vmatpush.msra.mxu0 0.0
    %2493 = vmatpush.msra.mxu0 0.0
    %2494 = vmatpush.msra.mxu0 0.0
    %2495 = vmatpush.msra.mxu0 0.0
    %2496 = vmatpush.msra.mxu0 0.0
    %2497 = vmatpush.msra.mxu0 0.0
    %2498 = vmatpush.msra.mxu0 0.0
    %2499 = vmatpush.msra.mxu0 0.0
    %2500 = vmatpush.msra.mxu0 0.0
    %v2501 = vand.u32 %v1061, 4294901760
    %v2502 = vsub.f32 %v1061, %v2501
    %2503 = vmatpush.msra.mxu0 %v2502
    %v2504 = vand.u32 %v1057, 4294901760
    %v2505 = vsub.f32 %v1057, %v2504
    %2506 = vmatpush.msra.mxu0 %v2505
    %v2507 = vand.u32 %v1652, 4294901760
    %v2508 = vsub.f32 %v1652, %v2507
    %2509 = vmatmul.f32.gmra.mxu0 %v2508
    %v2510 = vpop.f32.mrf.mxu0
    %v2511 = vadd.f32 %v2481, %v2510
    %v2512 = vand.u32 %v1655, 4294901760
    %v2513 = vsub.f32 %v1655, %v2512
    %2514 = vmatmul.f32.gmra.mxu0 %v2513
    %v2515 = vpop.f32.mrf.mxu0
    %v2516 = vadd.f32 %v2485, %v2515
    %2517 = vdwg.mxu0
    %2518 = vmatpush.msra.mxu0 0.0
    %2519 = vmatpush.msra.mxu0 0.0
    %2520 = vmatpush.msra.mxu0 0.0
    %2521 = vmatpush.msra.mxu0 0.0
    %2522 = vmatpush.msra.mxu0 0.0
    %2523 = vmatpush.msra.mxu0 0.0
    %2524 = vmatpush.msra.mxu0 0.0
    %2525 = vmatpush.msra.mxu0 0.0
    %2526 = vmatpush.msra.mxu0 0.0
    %2527 = vmatpush.msra.mxu0 0.0
    %2528 = vmatpush.msra.mxu0 0.0
    %2529 = vmatpush.msra.mxu0 0.0
    %2530 = vmatpush.msra.mxu0 0.0
    %2531 = vmatpush.msra.mxu0 0.0
    %v2532 = vand.u32 %v1061, 4294901760
    %2533 = vmatpush.msra.mxu0 %v2532
    %v2534 = vand.u32 %v1057, 4294901760
    %2535 = vmatpush.msra.mxu0 %v2534
    %v2536 = vand.u32 %v1652, 4294901760
    %v2537 = vsub.f32 %v1652, %v2536
    %v2538 = vand.u32 %v2537, 4294901760
    %2539 = vmatmul.f32.gmra.mxu0 %v2538
    %v2540 = vpop.f32.mrf.mxu0
    %v2541 = vadd.f32 %v2511, %v2540
    %v2542 = vand.u32 %v1655, 4294901760
    %v2543 = vsub.f32 %v1655, %v2542
    %v2544 = vand.u32 %v2543, 4294901760
    %2545 = vmatmul.f32.gmra.mxu0 %v2544
    %v2546 = vpop.f32.mrf.mxu0
    %v2547 = vadd.f32 %v2516, %v2546
    %2548 = vdwg.mxu0
    %2549 = vmatpush.msra.mxu0 0.0
    %2550 = vmatpush.msra.mxu0 0.0
    %2551 = vmatpush.msra.mxu0 0.0
    %2552 = vmatpush.msra.mxu0 0.0
    %2553 = vmatpush.msra.mxu0 0.0
    %2554 = vmatpush.msra.mxu0 0.0
    %2555 = vmatpush.msra.mxu0 0.0
    %2556 = vmatpush.msra.mxu0 0.0
    %2557 = vmatpush.msra.mxu0 0.0
    %2558 = vmatpush.msra.mxu0 0.0
    %2559 = vmatpush.msra.mxu0 0.0
    %2560 = vmatpush.msra.mxu0 0.0
    %2561 = vmatpush.msra.mxu0 0.0
    %2562 = vmatpush.msra.mxu0 0.0
    %v2563 = vand.u32 %v1061, 4294901760
    %v2564 = vsub.f32 %v1061, %v2563
    %v2565 = vand.u32 %v2564, 4294901760
    %2566 = vmatpush.msra.mxu0 %v2565
    %v2567 = vand.u32 %v1057, 4294901760
    %v2568 = vsub.f32 %v1057, %v2567
    %v2569 = vand.u32 %v2568, 4294901760
    %2570 = vmatpush.msra.mxu0 %v2569
    %v2571 = vand.u32 %v1652, 4294901760
    %2572 = vmatmul.f32.gmra.mxu0 %v2571
    %v2573 = vpop.f32.mrf.mxu0
    %v2574 = vadd.f32 %v2541, %v2573
    %v2575 = vand.u32 %v1655, 4294901760
    %2576 = vmatmul.f32.gmra.mxu0 %v2575
    %v2577 = vpop.f32.mrf.mxu0
    %v2578 = vadd.f32 %v2547, %v2577
    %2579 = vdwg.mxu0
    %2580 = vmatpush.msra.mxu0 0.0
    %2581 = vmatpush.msra.mxu0 0.0
    %2582 = vmatpush.msra.mxu0 0.0
    %2583 = vmatpush.msra.mxu0 0.0
    %2584 = vmatpush.msra.mxu0 0.0
    %2585 = vmatpush.msra.mxu0 0.0
    %2586 = vmatpush.msra.mxu0 0.0
    %2587 = vmatpush.msra.mxu0 0.0
    %2588 = vmatpush.msra.mxu0 0.0
    %2589 = vmatpush.msra.mxu0 0.0
    %2590 = vmatpush.msra.mxu0 0.0
    %2591 = vmatpush.msra.mxu0 0.0
    %2592 = vmatpush.msra.mxu0 0.0
    %2593 = vmatpush.msra.mxu0 0.0
    %v2594 = vand.u32 %v1061, 4294901760
    %2595 = vmatpush.msra.mxu0 %v2594
    %v2596 = vand.u32 %v1057, 4294901760
    %2597 = vmatpush.msra.mxu0 %v2596
    %v2598 = vand.u32 %v1652, 4294901760
    %2599 = vmatmul.f32.gmra.mxu0 %v2598
    %v2600 = vpop.f32.mrf.mxu0
    %v2601 = vadd.f32 %v2574, %v2600
    %v2602 = vand.u32 %v1655, 4294901760
    %2603 = vmatmul.f32.gmra.mxu0 %v2602
    %v2604 = vpop.f32.mrf.mxu0
    %v2605 = vadd.f32 %v2578, %v2604
    %2606 = vdwg.mxu0
    %2607 = vmatpush.msra.mxu0 0.0
    %2608 = vmatpush.msra.mxu0 0.0
    %2609 = vmatpush.msra.mxu0 0.0
    %2610 = vmatpush.msra.mxu0 0.0
    %2611 = vmatpush.msra.mxu0 0.0
    %2612 = vmatpush.msra.mxu0 0.0
    %2613 = vmatpush.msra.mxu0 0.0
    %2614 = vmatpush.msra.mxu0 0.0
    %2615 = vmatpush.msra.mxu0 0.0
    %2616 = vmatpush.msra.mxu0 0.0
    %2617 = vmatpush.msra.mxu0 0.0
    %2618 = vmatpush.msra.mxu0 0.0
    %2619 = vmatpush.msra.mxu0 0.0
    %2620 = vmatpush.msra.mxu0 0.0
    %v2621 = vand.u32 %v1257, 4294901760
    %2622 = vmatpush.msra.mxu0 %v2621
    %v2623 = vand.u32 %v1253, 4294901760
    %2624 = vmatpush.msra.mxu0 %v2623
    %v2625 = vand.u32 %v1652, 4294901760
    %v2626 = vsub.f32 %v1652, %v2625
    %v2627 = vand.u32 %v2626, 4294901760
    %v2628 = vsub.f32 %v2626, %v2627
    %v2629 = vand.u32 %v2628, 4294901760
    %2630 = vmatmul.f32.gmra.mxu0 %v2629
    %v2631 = vpop.f32.mrf.mxu0
    %v2632 = vadd.f32 0.0, %v2631
    %v2633 = vand.u32 %v1655, 4294901760
    %v2634 = vsub.f32 %v1655, %v2633
    %v2635 = vand.u32 %v2634, 4294901760
    %v2636 = vsub.f32 %v2634, %v2635
    %v2637 = vand.u32 %v2636, 4294901760
    %2638 = vmatmul.f32.gmra.mxu0 %v2637
    %v2639 = vpop.f32.mrf.mxu0
    %v2640 = vadd.f32 0.0, %v2639
    %2641 = vdwg.mxu0
    %2642 = vmatpush.msra.mxu0 0.0
    %2643 = vmatpush.msra.mxu0 0.0
    %2644 = vmatpush.msra.mxu0 0.0
    %2645 = vmatpush.msra.mxu0 0.0
    %2646 = vmatpush.msra.mxu0 0.0
    %2647 = vmatpush.msra.mxu0 0.0
    %2648 = vmatpush.msra.mxu0 0.0
    %2649 = vmatpush.msra.mxu0 0.0
    %2650 = vmatpush.msra.mxu0 0.0
    %2651 = vmatpush.msra.mxu0 0.0
    %2652 = vmatpush.msra.mxu0 0.0
    %2653 = vmatpush.msra.mxu0 0.0
    %2654 = vmatpush.msra.mxu0 0.0
    %2655 = vmatpush.msra.mxu0 0.0
    %v2656 = vand.u32 %v1257, 4294901760
    %v2657 = vsub.f32 %v1257, %v2656
    %v2658 = vand.u32 %v2657, 4294901760
    %v2659 = vsub.f32 %v2657, %v2658
    %v2660 = vand.u32 %v2659, 4294901760
    %2661 = vmatpush.msra.mxu0 %v2660
    %v2662 = vand.u32 %v1253, 4294901760
    %v2663 = vsub.f32 %v1253, %v2662
    %v2664 = vand.u32 %v2663, 4294901760
    %v2665 = vsub.f32 %v2663, %v2664
    %v2666 = vand.u32 %v2665, 4294901760
    %2667 = vmatpush.msra.mxu0 %v2666
    %v2668 = vand.u32 %v1652, 4294901760
    %2669 = vmatmul.f32.gmra.mxu0 %v2668
    %v2670 = vpop.f32.mrf.mxu0
    %v2671 = vadd.f32 %v2632, %v2670
    %v2672 = vand.u32 %v1655, 4294901760
    %2673 = vmatmul.f32.gmra.mxu0 %v2672
    %v2674 = vpop.f32.mrf.mxu0
    %v2675 = vadd.f32 %v2640, %v2674
    %2676 = vdwg.mxu0
    %2677 = vmatpush.msra.mxu0 0.0
    %2678 = vmatpush.msra.mxu0 0.0
    %2679 = vmatpush.msra.mxu0 0.0
    %2680 = vmatpush.msra.mxu0 0.0
    %2681 = vmatpush.msra.mxu0 0.0
    %2682 = vmatpush.msra.mxu0 0.0
    %2683 = vmatpush.msra.mxu0 0.0
    %2684 = vmatpush.msra.mxu0 0.0
    %2685 = vmatpush.msra.mxu0 0.0
    %2686 = vmatpush.msra.mxu0 0.0
    %2687 = vmatpush.msra.mxu0 0.0
    %2688 = vmatpush.msra.mxu0 0.0
    %2689 = vmatpush.msra.mxu0 0.0
    %2690 = vmatpush.msra.mxu0 0.0
    %v2691 = vand.u32 %v1257, 4294901760
    %v2692 = vsub.f32 %v1257, %v2691
    %2693 = vmatpush.msra.mxu0 %v2692
    %v2694 = vand.u32 %v1253, 4294901760
    %v2695 = vsub.f32 %v1253, %v2694
    %2696 = vmatpush.msra.mxu0 %v2695
    %v2697 = vand.u32 %v1652, 4294901760
    %v2698 = vsub.f32 %v1652, %v2697
    %2699 = vmatmul.f32.gmra.mxu0 %v2698
    %v2700 = vpop.f32.mrf.mxu0
    %v2701 = vadd.f32 %v2671, %v2700
    %v2702 = vand.u32 %v1655, 4294901760
    %v2703 = vsub.f32 %v1655, %v2702
    %2704 = vmatmul.f32.gmra.mxu0 %v2703
    %v2705 = vpop.f32.mrf.mxu0
    %v2706 = vadd.f32 %v2675, %v2705
    %2707 = vdwg.mxu0
    %2708 = vmatpush.msra.mxu0 0.0
    %2709 = vmatpush.msra.mxu0 0.0
    %2710 = vmatpush.msra.mxu0 0.0
    %2711 = vmatpush.msra.mxu0 0.0
    %2712 = vmatpush.msra.mxu0 0.0
    %2713 = vmatpush.msra.mxu0 0.0
    %2714 = vmatpush.msra.mxu0 0.0
    %2715 = vmatpush.msra.mxu0 0.0
    %2716 = vmatpush.msra.mxu0 0.0
    %2717 = vmatpush.msra.mxu0 0.0
    %2718 = vmatpush.msra.mxu0 0.0
    %2719 = vmatpush.msra.mxu0 0.0
    %2720 = vmatpush.msra.mxu0 0.0
    %2721 = vmatpush.msra.mxu0 0.0
    %v2722 = vand.u32 %v1257, 4294901760
    %2723 = vmatpush.msra.mxu0 %v2722
    %v2724 = vand.u32 %v1253, 4294901760
    %2725 = vmatpush.msra.mxu0 %v2724
    %v2726 = vand.u32 %v1652, 4294901760
    %v2727 = vsub.f32 %v1652, %v2726
    %v2728 = vand.u32 %v2727, 4294901760
    %2729 = vmatmul.f32.gmra.mxu0 %v2728
    %v2730 = vpop.f32.mrf.mxu0
    %v2731 = vadd.f32 %v2701, %v2730
    %v2732 = vand.u32 %v1655, 4294901760
    %v2733 = vsub.f32 %v1655, %v2732
    %v2734 = vand.u32 %v2733, 4294901760
    %2735 = vmatmul.f32.gmra.mxu0 %v2734
    %v2736 = vpop.f32.mrf.mxu0
    %v2737 = vadd.f32 %v2706, %v2736
    %2738 = vdwg.mxu0
    %2739 = vmatpush.msra.mxu0 0.0
    %2740 = vmatpush.msra.mxu0 0.0
    %2741 = vmatpush.msra.mxu0 0.0
    %2742 = vmatpush.msra.mxu0 0.0
    %2743 = vmatpush.msra.mxu0 0.0
    %2744 = vmatpush.msra.mxu0 0.0
    %2745 = vmatpush.msra.mxu0 0.0
    %2746 = vmatpush.msra.mxu0 0.0
    %2747 = vmatpush.msra.mxu0 0.0
    %2748 = vmatpush.msra.mxu0 0.0
    %2749 = vmatpush.msra.mxu0 0.0
    %2750 = vmatpush.msra.mxu0 0.0
    %2751 = vmatpush.msra.mxu0 0.0
    %2752 = vmatpush.msra.mxu0 0.0
    %v2753 = vand.u32 %v1257, 4294901760
    %v2754 = vsub.f32 %v1257, %v2753
    %v2755 = vand.u32 %v2754, 4294901760
    %2756 = vmatpush.msra.mxu0 %v2755
    %v2757 = vand.u32 %v1253, 4294901760
    %v2758 = vsub.f32 %v1253, %v2757
    %v2759 = vand.u32 %v2758, 4294901760
    %2760 = vmatpush.msra.mxu0 %v2759
    %v2761 = vand.u32 %v1652, 4294901760
    %2762 = vmatmul.f32.gmra.mxu0 %v2761
    %v2763 = vpop.f32.mrf.mxu0
    %v2764 = vadd.f32 %v2731, %v2763
    %v2765 = vand.u32 %v1655, 4294901760
    %2766 = vmatmul.f32.gmra.mxu0 %v2765
    %v2767 = vpop.f32.mrf.mxu0
    %v2768 = vadd.f32 %v2737, %v2767
    %2769 = vdwg.mxu0
    %2770 = vmatpush.msra.mxu0 0.0
    %2771 = vmatpush.msra.mxu0 0.0
    %2772 = vmatpush.msra.mxu0 0.0
    %2773 = vmatpush.msra.mxu0 0.0
    %2774 = vmatpush.msra.mxu0 0.0
    %2775 = vmatpush.msra.mxu0 0.0
    %2776 = vmatpush.msra.mxu0 0.0
    %2777 = vmatpush.msra.mxu0 0.0
    %2778 = vmatpush.msra.mxu0 0.0
    %2779 = vmatpush.msra.mxu0 0.0
    %2780 = vmatpush.msra.mxu0 0.0
    %2781 = vmatpush.msra.mxu0 0.0
    %2782 = vmatpush.msra.mxu0 0.0
    %2783 = vmatpush.msra.mxu0 0.0
    %v2784 = vand.u32 %v1257, 4294901760
    %2785 = vmatpush.msra.mxu0 %v2784
    %v2786 = vand.u32 %v1253, 4294901760
    %2787 = vmatpush.msra.mxu0 %v2786
    %v2788 = vand.u32 %v1652, 4294901760
    %2789 = vmatmul.f32.gmra.mxu0 %v2788
    %v2790 = vpop.f32.mrf.mxu0
    %v2791 = vadd.f32 %v2764, %v2790
    %v2792 = vand.u32 %v1655, 4294901760
    %2793 = vmatmul.f32.gmra.mxu0 %v2792
    %v2794 = vpop.f32.mrf.mxu0
    %v2795 = vadd.f32 %v2768, %v2794
    %2796 = vdwg.mxu0
    %2797 = vmatpush.msra.mxu0 0.0
    %2798 = vmatpush.msra.mxu0 0.0
    %2799 = vmatpush.msra.mxu0 0.0
    %2800 = vmatpush.msra.mxu0 0.0
    %2801 = vmatpush.msra.mxu0 0.0
    %2802 = vmatpush.msra.mxu0 0.0
    %2803 = vmatpush.msra.mxu0 0.0
    %2804 = vmatpush.msra.mxu0 0.0
    %2805 = vmatpush.msra.mxu0 0.0
    %2806 = vmatpush.msra.mxu0 0.0
    %2807 = vmatpush.msra.mxu0 0.0
    %2808 = vmatpush.msra.mxu0 0.0
    %2809 = vmatpush.msra.mxu0 0.0
    %2810 = vmatpush.msra.mxu0 0.0
    %v2811 = vand.u32 %v1453, 4294901760
    %2812 = vmatpush.msra.mxu0 %v2811
    %v2813 = vand.u32 %v1449, 4294901760
    %2814 = vmatpush.msra.mxu0 %v2813
    %v2815 = vand.u32 %v1652, 4294901760
    %v2816 = vsub.f32 %v1652, %v2815
    %v2817 = vand.u32 %v2816, 4294901760
    %v2818 = vsub.f32 %v2816, %v2817
    %v2819 = vand.u32 %v2818, 4294901760
    %2820 = vmatmul.f32.gmra.mxu0 %v2819
    %v2821 = vpop.f32.mrf.mxu0
    %v2822 = vadd.f32 0.0, %v2821
    %v2823 = vand.u32 %v1655, 4294901760
    %v2824 = vsub.f32 %v1655, %v2823
    %v2825 = vand.u32 %v2824, 4294901760
    %v2826 = vsub.f32 %v2824, %v2825
    %v2827 = vand.u32 %v2826, 4294901760
    %2828 = vmatmul.f32.gmra.mxu0 %v2827
    %v2829 = vpop.f32.mrf.mxu0
    %v2830 = vadd.f32 0.0, %v2829
    %2831 = vdwg.mxu0
    %2832 = vmatpush.msra.mxu0 0.0
    %2833 = vmatpush.msra.mxu0 0.0
    %2834 = vmatpush.msra.mxu0 0.0
    %2835 = vmatpush.msra.mxu0 0.0
    %2836 = vmatpush.msra.mxu0 0.0
    %2837 = vmatpush.msra.mxu0 0.0
    %2838 = vmatpush.msra.mxu0 0.0
    %2839 = vmatpush.msra.mxu0 0.0
    %2840 = vmatpush.msra.mxu0 0.0
    %2841 = vmatpush.msra.mxu0 0.0
    %2842 = vmatpush.msra.mxu0 0.0
    %2843 = vmatpush.msra.mxu0 0.0
    %2844 = vmatpush.msra.mxu0 0.0
    %2845 = vmatpush.msra.mxu0 0.0
    %v2846 = vand.u32 %v1453, 4294901760
    %v2847 = vsub.f32 %v1453, %v2846
    %v2848 = vand.u32 %v2847, 4294901760
    %v2849 = vsub.f32 %v2847, %v2848
    %v2850 = vand.u32 %v2849, 4294901760
    %2851 = vmatpush.msra.mxu0 %v2850
    %v2852 = vand.u32 %v1449, 4294901760
    %v2853 = vsub.f32 %v1449, %v2852
    %v2854 = vand.u32 %v2853, 4294901760
    %v2855 = vsub.f32 %v2853, %v2854
    %v2856 = vand.u32 %v2855, 4294901760
    %2857 = vmatpush.msra.mxu0 %v2856
    %v2858 = vand.u32 %v1652, 4294901760
    %2859 = vmatmul.f32.gmra.mxu0 %v2858
    %v2860 = vpop.f32.mrf.mxu0
    %v2861 = vadd.f32 %v2822, %v2860
    %v2862 = vand.u32 %v1655, 4294901760
    %2863 = vmatmul.f32.gmra.mxu0 %v2862
    %v2864 = vpop.f32.mrf.mxu0
    %v2865 = vadd.f32 %v2830, %v2864
    %2866 = vdwg.mxu0
    %2867 = vmatpush.msra.mxu0 0.0
    %2868 = vmatpush.msra.mxu0 0.0
    %2869 = vmatpush.msra.mxu0 0.0
    %2870 = vmatpush.msra.mxu0 0.0
    %2871 = vmatpush.msra.mxu0 0.0
    %2872 = vmatpush.msra.mxu0 0.0
    %2873 = vmatpush.msra.mxu0 0.0
    %2874 = vmatpush.msra.mxu0 0.0
    %2875 = vmatpush.msra.mxu0 0.0
    %2876 = vmatpush.msra.mxu0 0.0
    %2877 = vmatpush.msra.mxu0 0.0
    %2878 = vmatpush.msra.mxu0 0.0
    %2879 = vmatpush.msra.mxu0 0.0
    %2880 = vmatpush.msra.mxu0 0.0
    %v2881 = vand.u32 %v1453, 4294901760
    %v2882 = vsub.f32 %v1453, %v2881
    %2883 = vmatpush.msra.mxu0 %v2882
    %v2884 = vand.u32 %v1449, 4294901760
    %v2885 = vsub.f32 %v1449, %v2884
    %2886 = vmatpush.msra.mxu0 %v2885
    %v2887 = vand.u32 %v1652, 4294901760
    %v2888 = vsub.f32 %v1652, %v2887
    %2889 = vmatmul.f32.gmra.mxu0 %v2888
    %v2890 = vpop.f32.mrf.mxu0
    %v2891 = vadd.f32 %v2861, %v2890
    %v2892 = vand.u32 %v1655, 4294901760
    %v2893 = vsub.f32 %v1655, %v2892
    %2894 = vmatmul.f32.gmra.mxu0 %v2893
    %v2895 = vpop.f32.mrf.mxu0
    %v2896 = vadd.f32 %v2865, %v2895
    %2897 = vdwg.mxu0
    %2898 = vmatpush.msra.mxu0 0.0
    %2899 = vmatpush.msra.mxu0 0.0
    %2900 = vmatpush.msra.mxu0 0.0
    %2901 = vmatpush.msra.mxu0 0.0
    %2902 = vmatpush.msra.mxu0 0.0
    %2903 = vmatpush.msra.mxu0 0.0
    %2904 = vmatpush.msra.mxu0 0.0
    %2905 = vmatpush.msra.mxu0 0.0
    %2906 = vmatpush.msra.mxu0 0.0
    %2907 = vmatpush.msra.mxu0 0.0
    %2908 = vmatpush.msra.mxu0 0.0
    %2909 = vmatpush.msra.mxu0 0.0
    %2910 = vmatpush.msra.mxu0 0.0
    %2911 = vmatpush.msra.mxu0 0.0
    %v2912 = vand.u32 %v1453, 4294901760
    %2913 = vmatpush.msra.mxu0 %v2912
    %v2914 = vand.u32 %v1449, 4294901760
    %2915 = vmatpush.msra.mxu0 %v2914
    %v2916 = vand.u32 %v1652, 4294901760
    %v2917 = vsub.f32 %v1652, %v2916
    %v2918 = vand.u32 %v2917, 4294901760
    %2919 = vmatmul.f32.gmra.mxu0 %v2918
    %v2920 = vpop.f32.mrf.mxu0
    %v2921 = vadd.f32 %v2891, %v2920
    %v2922 = vand.u32 %v1655, 4294901760
    %v2923 = vsub.f32 %v1655, %v2922
    %v2924 = vand.u32 %v2923, 4294901760
    %2925 = vmatmul.f32.gmra.mxu0 %v2924
    %v2926 = vpop.f32.mrf.mxu0
    %v2927 = vadd.f32 %v2896, %v2926
    %2928 = vdwg.mxu0
    %2929 = vmatpush.msra.mxu0 0.0
    %2930 = vmatpush.msra.mxu0 0.0
    %2931 = vmatpush.msra.mxu0 0.0
    %2932 = vmatpush.msra.mxu0 0.0
    %2933 = vmatpush.msra.mxu0 0.0
    %2934 = vmatpush.msra.mxu0 0.0
    %2935 = vmatpush.msra.mxu0 0.0
    %2936 = vmatpush.msra.mxu0 0.0
    %2937 = vmatpush.msra.mxu0 0.0
    %2938 = vmatpush.msra.mxu0 0.0
    %2939 = vmatpush.msra.mxu0 0.0
    %2940 = vmatpush.msra.mxu0 0.0
    %2941 = vmatpush.msra.mxu0 0.0
    %2942 = vmatpush.msra.mxu0 0.0
    %v2943 = vand.u32 %v1453, 4294901760
    %v2944 = vsub.f32 %v1453, %v2943
    %v2945 = vand.u32 %v2944, 4294901760
    %2946 = vmatpush.msra.mxu0 %v2945
    %v2947 = vand.u32 %v1449, 4294901760
    %v2948 = vsub.f32 %v1449, %v2947
    %v2949 = vand.u32 %v2948, 4294901760
    %2950 = vmatpush.msra.mxu0 %v2949
    %v2951 = vand.u32 %v1652, 4294901760
    %2952 = vmatmul.f32.gmra.mxu0 %v2951
    %v2953 = vpop.f32.mrf.mxu0
    %v2954 = vadd.f32 %v2921, %v2953
    %v2955 = vand.u32 %v1655, 4294901760
    %2956 = vmatmul.f32.gmra.mxu0 %v2955
    %v2957 = vpop.f32.mrf.mxu0
    %v2958 = vadd.f32 %v2927, %v2957
    %2959 = vdwg.mxu0
    %2960 = vmatpush.msra.mxu0 0.0
    %2961 = vmatpush.msra.mxu0 0.0
    %2962 = vmatpush.msra.mxu0 0.0
    %2963 = vmatpush.msra.mxu0 0.0
    %2964 = vmatpush.msra.mxu0 0.0
    %2965 = vmatpush.msra.mxu0 0.0
    %2966 = vmatpush.msra.mxu0 0.0
    %2967 = vmatpush.msra.mxu0 0.0
    %2968 = vmatpush.msra.mxu0 0.0
    %2969 = vmatpush.msra.mxu0 0.0
    %2970 = vmatpush.msra.mxu0 0.0
    %2971 = vmatpush.msra.mxu0 0.0
    %2972 = vmatpush.msra.mxu0 0.0
    %2973 = vmatpush.msra.mxu0 0.0
    %v2974 = vand.u32 %v1453, 4294901760
    %2975 = vmatpush.msra.mxu0 %v2974
    %v2976 = vand.u32 %v1449, 4294901760
    %2977 = vmatpush.msra.mxu0 %v2976
    %v2978 = vand.u32 %v1652, 4294901760
    %2979 = vmatmul.f32.gmra.mxu0 %v2978
    %v2980 = vpop.f32.mrf.mxu0
    %v2981 = vadd.f32 %v2954, %v2980
    %v2982 = vand.u32 %v1655, 4294901760
    %2983 = vmatmul.f32.gmra.mxu0 %v2982
    %v2984 = vpop.f32.mrf.mxu0
    %v2985 = vadd.f32 %v2958, %v2984
    %2986 = vdwg.mxu0
    %2987 = vmatpush.msra.mxu0 0.0
    %2988 = vmatpush.msra.mxu0 0.0
    %2989 = vmatpush.msra.mxu0 0.0
    %2990 = vmatpush.msra.mxu0 0.0
    %2991 = vmatpush.msra.mxu0 0.0
    %2992 = vmatpush.msra.mxu0 0.0
    %2993 = vmatpush.msra.mxu0 0.0
    %2994 = vmatpush.msra.mxu0 0.0
    %2995 = vmatpush.msra.mxu0 0.0
    %2996 = vmatpush.msra.mxu0 0.0
    %2997 = vmatpush.msra.mxu0 0.0
    %2998 = vmatpush.msra.mxu0 0.0
    %2999 = vmatpush.msra.mxu0 0.0
    %3000 = vmatpush.msra.mxu0 0.0
    %v3001 = vand.u32 %v1649, 4294901760
    %3002 = vmatpush.msra.mxu0 %v3001
    %v3003 = vand.u32 %v1645, 4294901760
    %3004 = vmatpush.msra.mxu0 %v3003
    %v3005 = vand.u32 %v1652, 4294901760
    %v3006 = vsub.f32 %v1652, %v3005
    %v3007 = vand.u32 %v3006, 4294901760
    %v3008 = vsub.f32 %v3006, %v3007
    %v3009 = vand.u32 %v3008, 4294901760
    %3010 = vmatmul.f32.gmra.mxu0 %v3009
    %v3011 = vpop.f32.mrf.mxu0
    %v3012 = vadd.f32 0.0, %v3011
    %v3013 = vand.u32 %v1655, 4294901760
    %v3014 = vsub.f32 %v1655, %v3013
    %v3015 = vand.u32 %v3014, 4294901760
    %v3016 = vsub.f32 %v3014, %v3015
    %v3017 = vand.u32 %v3016, 4294901760
    %3018 = vmatmul.f32.gmra.mxu0 %v3017
    %v3019 = vpop.f32.mrf.mxu0
    %v3020 = vadd.f32 0.0, %v3019
    %3021 = vdwg.mxu0
    %3022 = vmatpush.msra.mxu0 0.0
    %3023 = vmatpush.msra.mxu0 0.0
    %3024 = vmatpush.msra.mxu0 0.0
    %3025 = vmatpush.msra.mxu0 0.0
    %3026 = vmatpush.msra.mxu0 0.0
    %3027 = vmatpush.msra.mxu0 0.0
    %3028 = vmatpush.msra.mxu0 0.0
    %3029 = vmatpush.msra.mxu0 0.0
    %3030 = vmatpush.msra.mxu0 0.0
    %3031 = vmatpush.msra.mxu0 0.0
    %3032 = vmatpush.msra.mxu0 0.0
    %3033 = vmatpush.msra.mxu0 0.0
    %3034 = vmatpush.msra.mxu0 0.0
    %3035 = vmatpush.msra.mxu0 0.0
    %v3036 = vand.u32 %v1649, 4294901760
    %v3037 = vsub.f32 %v1649, %v3036
    %v3038 = vand.u32 %v3037, 4294901760
    %v3039 = vsub.f32 %v3037, %v3038
    %v3040 = vand.u32 %v3039, 4294901760
    %3041 = vmatpush.msra.mxu0 %v3040
    %v3042 = vand.u32 %v1645, 4294901760
    %v3043 = vsub.f32 %v1645, %v3042
    %v3044 = vand.u32 %v3043, 4294901760
    %v3045 = vsub.f32 %v3043, %v3044
    %v3046 = vand.u32 %v3045, 4294901760
    %3047 = vmatpush.msra.mxu0 %v3046
    %v3048 = vand.u32 %v1652, 4294901760
    %3049 = vmatmul.f32.gmra.mxu0 %v3048
    %v3050 = vpop.f32.mrf.mxu0
    %v3051 = vadd.f32 %v3012, %v3050
    %v3052 = vand.u32 %v1655, 4294901760
    %3053 = vmatmul.f32.gmra.mxu0 %v3052
    %v3054 = vpop.f32.mrf.mxu0
    %v3055 = vadd.f32 %v3020, %v3054
    %3056 = vdwg.mxu0
    %3057 = vmatpush.msra.mxu0 0.0
    %3058 = vmatpush.msra.mxu0 0.0
    %3059 = vmatpush.msra.mxu0 0.0
    %3060 = vmatpush.msra.mxu0 0.0
    %3061 = vmatpush.msra.mxu0 0.0
    %3062 = vmatpush.msra.mxu0 0.0
    %3063 = vmatpush.msra.mxu0 0.0
    %3064 = vmatpush.msra.mxu0 0.0
    %3065 = vmatpush.msra.mxu0 0.0
    %3066 = vmatpush.msra.mxu0 0.0
    %3067 = vmatpush.msra.mxu0 0.0
    %3068 = vmatpush.msra.mxu0 0.0
    %3069 = vmatpush.msra.mxu0 0.0
    %3070 = vmatpush.msra.mxu0 0.0
    %v3071 = vand.u32 %v1649, 4294901760
    %v3072 = vsub.f32 %v1649, %v3071
    %3073 = vmatpush.msra.mxu0 %v3072
    %v3074 = vand.u32 %v1645, 4294901760
    %v3075 = vsub.f32 %v1645, %v3074
    %3076 = vmatpush.msra.mxu0 %v3075
    %v3077 = vand.u32 %v1652, 4294901760
    %v3078 = vsub.f32 %v1652, %v3077
    %3079 = vmatmul.f32.gmra.mxu0 %v3078
    %v3080 = vpop.f32.mrf.mxu0
    %v3081 = vadd.f32 %v3051, %v3080
    %v3082 = vand.u32 %v1655, 4294901760
    %v3083 = vsub.f32 %v1655, %v3082
    %3084 = vmatmul.f32.gmra.mxu0 %v3083
    %v3085 = vpop.f32.mrf.mxu0
    %v3086 = vadd.f32 %v3055, %v3085
    %3087 = vdwg.mxu0
    %3088 = vmatpush.msra.mxu0 0.0
    %3089 = vmatpush.msra.mxu0 0.0
    %3090 = vmatpush.msra.mxu0 0.0
    %3091 = vmatpush.msra.mxu0 0.0
    %3092 = vmatpush.msra.mxu0 0.0
    %3093 = vmatpush.msra.mxu0 0.0
    %3094 = vmatpush.msra.mxu0 0.0
    %3095 = vmatpush.msra.mxu0 0.0
    %3096 = vmatpush.msra.mxu0 0.0
    %3097 = vmatpush.msra.mxu0 0.0
    %3098 = vmatpush.msra.mxu0 0.0
    %3099 = vmatpush.msra.mxu0 0.0
    %3100 = vmatpush.msra.mxu0 0.0
    %3101 = vmatpush.msra.mxu0 0.0
    %v3102 = vand.u32 %v1649, 4294901760
    %3103 = vmatpush.msra.mxu0 %v3102
    %v3104 = vand.u32 %v1645, 4294901760
    %3105 = vmatpush.msra.mxu0 %v3104
    %v3106 = vand.u32 %v1652, 4294901760
    %v3107 = vsub.f32 %v1652, %v3106
    %v3108 = vand.u32 %v3107, 4294901760
    %3109 = vmatmul.f32.gmra.mxu0 %v3108
    %v3110 = vpop.f32.mrf.mxu0
    %v3111 = vadd.f32 %v3081, %v3110
    %v3112 = vand.u32 %v1655, 4294901760
    %v3113 = vsub.f32 %v1655, %v3112
    %v3114 = vand.u32 %v3113, 4294901760
    %3115 = vmatmul.f32.gmra.mxu0 %v3114
    %v3116 = vpop.f32.mrf.mxu0
    %v3117 = vadd.f32 %v3086, %v3116
    %3118 = vdwg.mxu0
    %3119 = vmatpush.msra.mxu0 0.0
    %3120 = vmatpush.msra.mxu0 0.0
    %3121 = vmatpush.msra.mxu0 0.0
    %3122 = vmatpush.msra.mxu0 0.0
    %3123 = vmatpush.msra.mxu0 0.0
    %3124 = vmatpush.msra.mxu0 0.0
    %3125 = vmatpush.msra.mxu0 0.0
    %3126 = vmatpush.msra.mxu0 0.0
    %3127 = vmatpush.msra.mxu0 0.0
    %3128 = vmatpush.msra.mxu0 0.0
    %3129 = vmatpush.msra.mxu0 0.0
    %3130 = vmatpush.msra.mxu0 0.0
    %3131 = vmatpush.msra.mxu0 0.0
    %3132 = vmatpush.msra.mxu0 0.0
    %v3133 = vand.u32 %v1649, 4294901760
    %v3134 = vsub.f32 %v1649, %v3133
    %v3135 = vand.u32 %v3134, 4294901760
    %3136 = vmatpush.msra.mxu0 %v3135
    %v3137 = vand.u32 %v1645, 4294901760
    %v3138 = vsub.f32 %v1645, %v3137
    %v3139 = vand.u32 %v3138, 4294901760
    %3140 = vmatpush.msra.mxu0 %v3139
    %v3141 = vand.u32 %v1652, 4294901760
    %3142 = vmatmul.f32.gmra.mxu0 %v3141
    %v3143 = vpop.f32.mrf.mxu0
    %v3144 = vadd.f32 %v3111, %v3143
    %v3145 = vand.u32 %v1655, 4294901760
    %3146 = vmatmul.f32.gmra.mxu0 %v3145
    %v3147 = vpop.f32.mrf.mxu0
    %v3148 = vadd.f32 %v3117, %v3147
    %3149 = vdwg.mxu0
    %3150 = vmatpush.msra.mxu0 0.0
    %3151 = vmatpush.msra.mxu0 0.0
    %3152 = vmatpush.msra.mxu0 0.0
    %3153 = vmatpush.msra.mxu0 0.0
    %3154 = vmatpush.msra.mxu0 0.0
    %3155 = vmatpush.msra.mxu0 0.0
    %3156 = vmatpush.msra.mxu0 0.0
    %3157 = vmatpush.msra.mxu0 0.0
    %3158 = vmatpush.msra.mxu0 0.0
    %3159 = vmatpush.msra.mxu0 0.0
    %3160 = vmatpush.msra.mxu0 0.0
    %3161 = vmatpush.msra.mxu0 0.0
    %3162 = vmatpush.msra.mxu0 0.0
    %3163 = vmatpush.msra.mxu0 0.0
    %v3164 = vand.u32 %v1649, 4294901760
    %3165 = vmatpush.msra.mxu0 %v3164
    %v3166 = vand.u32 %v1645, 4294901760
    %3167 = vmatpush.msra.mxu0 %v3166
    %v3168 = vand.u32 %v1652, 4294901760
    %3169 = vmatmul.f32.gmra.mxu0 %v3168
    %v3170 = vpop.f32.mrf.mxu0
    %v3171 = vadd.f32 %v3144, %v3170
    %v3172 = vand.u32 %v1655, 4294901760
    %3173 = vmatmul.f32.gmra.mxu0 %v3172
    %v3174 = vpop.f32.mrf.mxu0
    %v3175 = vadd.f32 %v3148, %v3174
    %3176 = vdwg.mxu0
    %v3177 = vmax.f32 %v1841, 0.0
    %v3178 = vmax.f32 %v1845, 0.0
    %v3179 = vmax.f32 %v2031, 0.0
    %v3180 = vmax.f32 %v2035, 0.0
    %v3181 = vmax.f32 %v2221, 0.0
    %v3182 = vmax.f32 %v2225, 0.0
    %v3183 = vmax.f32 %v2411, 0.0
    %v3184 = vmax.f32 %v2415, 0.0
    %v3185 = vmax.f32 %v2601, 0.0
    %v3186 = vmax.f32 %v2605, 0.0
    %v3187 = vmax.f32 %v2791, 0.0
    %v3188 = vmax.f32 %v2795, 0.0
    %v3189 = vmax.f32 %v2981, 0.0
    %v3190 = vmax.f32 %v2985, 0.0
    %v3191 = vmax.f32 %v3171, 0.0
    %v3192 = vmax.f32 %v3175, 0.0
    %v3193 = vmin.f32 %v3177, 1.0
    %v3194 = vmin.f32 %v3178, 1.0
    %v3195 = vmin.f32 %v3179, 1.0
    %v3196 = vmin.f32 %v3180, 1.0
    %v3197 = vmin.f32 %v3181, 1.0
    %v3198 = vmin.f32 %v3182, 1.0
    %v3199 = vmin.f32 %v3183, 1.0
    %v3200 = vmin.f32 %v3184, 1.0
    %v3201 = vmin.f32 %v3185, 1.0
    %v3202 = vmin.f32 %v3186, 1.0
    %v3203 = vmin.f32 %v3187, 1.0
    %v3204 = vmin.f32 %v3188, 1.0
    %v3205 = vmin.f32 %v3189, 1.0
    %v3206 = vmin.f32 %v3190, 1.0
    %v3207 = vmin.f32 %v3191, 1.0
    %v3208 = vmin.f32 %v3192, 1.0
    %3209 = vst.msk [vmem:[#allocation8] sm:$0xff] %vm82, %v3193
    %3210 = vst.msk [vmem:[#allocation8 + $0x8] sm:$0xff] %vm82, %v3194
    %3211 = vst.msk [vmem:[#allocation8 + $0x10] sm:$0xff] %vm82, %v3195
    %3212 = vst.msk [vmem:[#allocation8 + $0x18] sm:$0xff] %vm82, %v3196
    %3213 = vst.msk [vmem:[#allocation8 + $0x20] sm:$0xff] %vm82, %v3197
    %3214 = vst.msk [vmem:[#allocation8 + $0x28] sm:$0xff] %vm82, %v3198
    %3215 = vst.msk [vmem:[#allocation8 + $0x30] sm:$0xff] %vm82, %v3199
    %3216 = vst.msk [vmem:[#allocation8 + $0x38] sm:$0xff] %vm82, %v3200
    %3217 = vst.msk [vmem:[#allocation8 + $0x40] sm:$0xff] %vm82, %v3201
    %3218 = vst.msk [vmem:[#allocation8 + $0x48] sm:$0xff] %vm82, %v3202
    %3219 = vst.msk [vmem:[#allocation8 + $0x50] sm:$0xff] %vm82, %v3203
    %3220 = vst.msk [vmem:[#allocation8 + $0x58] sm:$0xff] %vm82, %v3204
    %3221 = vst.msk [vmem:[#allocation8 + $0x60] sm:$0xff] %vm82, %v3205
    %3222 = vst.msk [vmem:[#allocation8 + $0x68] sm:$0xff] %vm82, %v3206
    %3223 = vst.msk [vmem:[#allocation8 + $0x70] sm:$0xff] %vm82, %v3207
    %3224 = vst.msk [vmem:[#allocation8 + $0x78] sm:$0xff] %vm82, %v3208
    // Predicated region
    $region26: #{tpu_custom_call.1} parent=1 // pred_check
      _
    $region27: #{tpu_custom_call.1} parent=1 // pred_check_branch
      %3226 = sbr.rel (0) target = $region29
    $region28: #{tpu_custom_call.1} parent=1 // pred_region
      %3228 = vsyncadd [#allocation4], 0
      %s3229 = sshll.u32 [#allocation8], 4
      %s3230 = int_to_ptr.vmem [resolvable:$true] %s3229
      %s3231 = sshll.u32 %s3, 4
      %s3232 = int_to_ptr.hbm [resolvable:$true] %s3231
      %3237 = dma.vmem_to_hbm [thread:$0]  %s3230, 2048, %s3232, [#allocation4], 128, 128, 8
    $region29: #{tpu_custom_call.1} parent=1 // pred_fallthru
      _
    // Predicated region
    $region30: #{tpu_custom_call.1} parent=1 // pred_check
      _
    $region31: #{tpu_custom_call.1} parent=1 // pred_check_branch
      %3239 = sbr.rel (0) target = $region33
    $region32: #{tpu_custom_call.1} parent=1 // pred_region
      %3241 = dma.done [#allocation4], 2048
    $region33: #{tpu_custom_call.1} parent=1 // pred_fallthru
      _
    %3242 = vsyncpa [#allocation3], 1
    %3243 = vsyncpa [#allocation6], 1
    %3244 = vsyncpa [#allocation4], 1

</llo_original>
